<compile_context>
chip_gen: v6e
topology: v6e:2x2x1
jax: 0.10.0
libtpu: 0.0.40
codegen_flags: <defaults>
</compile_context>

<pallas_src>
import functools

import jax
import jax.numpy as jnp
from jax.experimental import pallas as pl
from jax.experimental.pallas import tpu as pltpu

H = 32            # LSTM hidden size (module fixes 16*s_dim == 32 -> s_dim == 2)
G = 4 * H         # gate width = 128 (exactly one vreg lane extent)
XP = 16           # padded input feature width (s_dim cols + 1 bias col + zeros)
P_ROWS = 96       # parameter slab rows (16-row aligned segments for bf16 tiles)


def actor_net_kernel(x_ref, p_ref, out_ref):
    """One batch-block of sequences, fully VMEM-resident.

    x_ref  : (seq, Bb, XP) f32  time-major inputs; column s_dim is a constant
             1.0 that folds the LSTM bias into the input matmul, rest zero.
    p_ref  : (96, 128) bf16 packed parameter slab (see pack_params).
    out_ref: (seq, Bb, 128) f32 lane-dense output; only lanes [0:2] meaningful.
    """
    seq, bb, _ = x_ref.shape

    wih = p_ref[0:16, :]       # (16, 4H) bf16: rows [0:s_dim]=W_ih^T, [s_dim]=b
    whh = p_ref[16:48, :]      # (32, 4H) bf16
    w12 = p_ref[48:80, :]      # (32, 4H) bf16: fused fc1@fc2 (lanes 0:2 nonzero)
    b12 = p_ref[80:81, :].astype(jnp.float32)   # (1, 4H): fused bias (lanes 0:2)

    # Hoisted input-side contribution for the whole block (bias included via
    # the ones column): one (seq*Bb, 16) @ (16, 128) bf16 MXU matmul.
    x_all = jnp.concatenate([x_ref[t] for t in range(seq)], axis=0)  # (seq*Bb, XP)
    gates_x = jnp.dot(x_all.astype(jnp.bfloat16), wih,
                      preferred_element_type=jnp.float32)            # (seq*Bb, 4H)

    h = jnp.zeros((bb, H), jnp.float32)
    c = jnp.zeros((bb, H), jnp.float32)
    hs = []
    # Statically unrolled recurrence (seq is small & static). Only the
    # (Bb,32)x(32,128) bf16 matmul + gate math sit on the serial chain.
    # TODO(synk): for seq >~ 32 switch to lax.fori_loop with a VMEM hs scratch
    # to bound vreg live ranges, and stage whh in the MXU across steps via
    # pltpu.matmul_push_rhs / matmul_acc_lhs / matmul_pop.
    for t in range(seq):
        gates = gates_x[t * bb:(t + 1) * bb, :] + jnp.dot(
            h.astype(jnp.bfloat16), whh, preferred_element_type=jnp.float32)
        sig = jax.nn.sigmoid(gates)   # one EUP pass over the full (Bb, 4H) tile
        tnh = jnp.tanh(gates)         # one EUP pass over the full (Bb, 4H) tile
        i_g = sig[:, 0 * H:1 * H]
        f_g = sig[:, 1 * H:2 * H]
        g_g = tnh[:, 2 * H:3 * H]
        o_g = sig[:, 3 * H:4 * H]
        c = f_g * c + i_g * g_g
        h = o_g * jnp.tanh(c)
        hs.append(h)                  # compiler-held; no VMEM scratch round-trip

    # Fused fc1+fc2 -> tanh -> *2 over all hidden states at once. Padded lanes
    # of w12/b12 are exactly zero, so padded output lanes are exactly zero.
    hs_all = jnp.concatenate(hs, axis=0)                              # (seq*Bb, H)
    z = jnp.dot(hs_all.astype(jnp.bfloat16), w12,
                preferred_element_type=jnp.float32) + b12             # (seq*Bb, 4H)
    y = jnp.tanh(z) * 2.0
    for t in range(seq):
        out_ref[t] = y[t * bb:(t + 1) * bb, :]


@functools.partial(jax.jit, static_argnames=("block_b",))
def actor_net_forward(x, packed_params, *, block_b=8):
    """x: (B, seq, s_dim) batch of independent sequences -> (B, seq, 2)."""
    B, seq, s_dim = x.shape
    bpad = (-(-B // block_b)) * block_b          # round batch up to block multiple

    # Time-major, feature-padded input with a constant-1 bias column so the
    # LSTM bias rides the hoisted input matmul. Fuses into this jit.
    x_t = jnp.swapaxes(x, 0, 1).astype(jnp.float32)          # (seq, B, s_dim)
    x_pad = jnp.zeros((seq, bpad, XP), jnp.float32)
    x_pad = x_pad.at[:, :B, :s_dim].set(x_t)
    x_pad = x_pad.at[:, :B, s_dim].set(1.0)

    grid = (bpad // block_b,)
    flops = bpad * seq * (2 * XP * G + 2 * H * G + 2 * H * G)
    transc = bpad * seq * (2 * G + H + G)
    bytes_acc = x_pad.size * 4 + P_ROWS * G * 2 + seq * bpad * G * 4

    out = pl.pallas_call(
        actor_net_kernel,
        out_shape=jax.ShapeDtypeStruct((seq, bpad, G), jnp.float32),
        grid=grid,
        in_specs=[
            pl.BlockSpec((seq, block_b, XP), lambda b: (0, b, 0)),
            pl.BlockSpec((P_ROWS, G), lambda b: (0, 0)),   # slab resident, 1 DMA
        ],
        out_specs=pl.BlockSpec((seq, block_b, G), lambda b: (0, b, 0)),
        compiler_params=pltpu.CompilerParams(
            dimension_semantics=("parallel",)),  # v7x: shard batch over 2 TCs
        cost_estimate=pl.CostEstimate(
            flops=flops, transcendentals=transc, bytes_accessed=bytes_acc),
    )(x_pad, packed_params)

    # Lane-dense kernel output -> (B, seq, 2); padded batch rows dropped.
    return jnp.swapaxes(out[:, :B, :2], 0, 1)


def init_params(key, s_dim, hidden=H):
    assert 16 * s_dim == hidden, "original module requires 16*s_dim == 32 (s_dim=2)"
    ks = jax.random.split(key, 8)
    u = lambda k, shape, s: jax.random.uniform(k, shape, jnp.float32, -s, s)
    bound = 1.0 / jnp.sqrt(hidden)
    # LSTM weights (PyTorch stores (4H, in)/(4H, H); we keep transposed copies)
    wih = u(ks[0], (4 * hidden, s_dim), bound)
    whh = u(ks[1], (4 * hidden, hidden), bound)
    bih = u(ks[2], (4 * hidden,), bound)
    bhh = u(ks[3], (4 * hidden,), bound)
    # fc1: Linear(16*s_dim, 32), fc2: Linear(32, 2)
    w1 = u(ks[4], (hidden, 16 * s_dim), 1.0 / jnp.sqrt(16 * s_dim))
    b1 = u(ks[5], (hidden,), 1.0 / jnp.sqrt(16 * s_dim))
    w2 = u(ks[6], (2, hidden), 1.0 / jnp.sqrt(hidden))
    b2 = u(ks[7], (2,), 1.0 / jnp.sqrt(hidden))
    return {
        "wih_t": wih.T,                               # (s_dim, 4H)
        "whh_t": whh.T,                               # (H, 4H)
        "b_lstm": (bih + bhh).reshape(1, 4 * hidden), # (1, 4H)
        "w1_t": w1.T,                                 # (32, 32)
        "b1": b1.reshape(1, hidden),                  # (1, 32)
        "w2_t": w2.T,                                 # (32, 2)
        "b2": b2.reshape(1, 2),                       # (1, 2)
    }


def pack_params(params, s_dim, hidden=H):
    """Pack all weights into one (96, 128) bf16 slab, 16-row aligned segments:
       rows  0:16  -> W_ih^T in rows [0:s_dim], (b_ih+b_hh) in row [s_dim]
                      (picked up by the constant-1 input column), rest zero
       rows 16:48  -> W_hh^T
       rows 48:80  -> fused fc weight  W1^T @ W2^T   (lanes 0:2)
       row  80     -> fused fc bias    b1 @ W2^T + b2 (lanes 0:2)
    bf16 operands feed the MXU directly; accumulation stays f32 in-kernel.
    """
    g = 4 * hidden
    w12 = params["w1_t"] @ params["w2_t"]                  # (32, 2)
    b12 = params["b1"] @ params["w2_t"] + params["b2"]     # (1, 2)
    slab = jnp.zeros((P_ROWS, g), jnp.float32)
    slab = slab.at[0:s_dim, :].set(params["wih_t"])
    slab = slab.at[s_dim:s_dim + 1, :].set(params["b_lstm"])
    slab = slab.at[16:16 + hidden, :].set(params["whh_t"])
    slab = slab.at[48:48 + hidden, 0:2].set(w12)
    slab = slab.at[80:81, 0:2].set(b12)
    return slab.astype(jnp.bfloat16)


def actor_net_reference(x, params):
    # Pure-JAX f32 reference with the ORIGINAL (un-fused, un-hoisted) math
    # for a single (seq, s_dim) sequence.
    seq = x.shape[0]
    h = jnp.zeros((1, H), jnp.float32)
    c = jnp.zeros((1, H), jnp.float32)
    hs = []
    for t in range(seq):
        gates = (x[t:t + 1] @ params["wih_t"] + h @ params["whh_t"]
                 + params["b_lstm"])
        i_g = jax.nn.sigmoid(gates[:, 0 * H:1 * H])
        f_g = jax.nn.sigmoid(gates[:, 1 * H:2 * H])
        g_g = jnp.tanh(gates[:, 2 * H:3 * H])
        o_g = jax.nn.sigmoid(gates[:, 3 * H:4 * H])
        c = f_g * c + i_g * g_g
        h = o_g * jnp.tanh(c)
        hs.append(h)
    lstm_out = jnp.concatenate(hs, axis=0)
    z1 = lstm_out @ params["w1_t"] + params["b1"]
    z2 = z1 @ params["w2_t"] + params["b2"]
    return jnp.tanh(z2) * 2.0


if __name__ == "__main__":
    # forward() of the original module forces s_dim = 2 (16*s_dim == 32).
    B, seq, s_dim, a_dim = 16, 8, 2, 2
    key = jax.random.PRNGKey(0)
    kx, kp = jax.random.split(key)
    x = jax.random.normal(kx, (B, seq, s_dim), jnp.float32)
    params = init_params(kp, s_dim)
    packed = pack_params(params, s_dim)

    out = actor_net_forward(x, packed, block_b=8)
    out = jax.block_until_ready(out)

    ref = jax.jit(jax.vmap(lambda xb: actor_net_reference(xb, params)))(x)
    assert out.shape == (B, seq, a_dim)
    # Tolerance loosened vs the all-f32 version because the parameter slab is
    # bf16 (operand rounding compounds slightly over the 8 LSTM steps).
    assert jnp.allclose(out, ref, rtol=2e-2, atol=2e-2), "mismatch vs reference"

    print("KERNEL_OK")
</pallas_src>

<mosaic_0001>
module attributes {stable_mosaic.version = 11 : i64} {
  func.func @actor_net_kernel(%arg0: i32, %arg1: memref<8x8x16xf32, #tpu.memory_space<vmem>>, %arg2: memref<96x128xbf16, #tpu.memory_space<vmem>>, %arg3: memref<8x8x128xf32, #tpu.memory_space<vmem>>) attributes {dimension_semantics = [#tpu.dimension_semantics<parallel>], iteration_bounds = array<i64: 2>, scalar_prefetch = 0 : i64, scratch_operands = 0 : i64, tpu.core_type = #tpu.core_type<tc>, window_params = [{transform_indices = @transform_0, window_bounds = array<i64: 8, 8, 16>}, {pipeline_mode = #tpu.pipeline_mode<synchronous>, transform_indices = @transform_1, window_bounds = array<i64: 96, 128>}, {transform_indices = @transform_2, window_bounds = array<i64: 8, 8, 128>}]} {
    %c0 = arith.constant 0 : index
    %c0_0 = arith.constant 0 : index
    %0 = vector.load %arg2[%c0, %c0_0] : memref<96x128xbf16, #tpu.memory_space<vmem>>, vector<16x128xbf16>
    %c16 = arith.constant 16 : index
    %c0_1 = arith.constant 0 : index
    %1 = vector.load %arg2[%c16, %c0_1] : memref<96x128xbf16, #tpu.memory_space<vmem>>, vector<32x128xbf16>
    %c48 = arith.constant 48 : index
    %c0_2 = arith.constant 0 : index
    %2 = vector.load %arg2[%c48, %c0_2] : memref<96x128xbf16, #tpu.memory_space<vmem>>, vector<32x128xbf16>
    %c80 = arith.constant 80 : index
    %c0_3 = arith.constant 0 : index
    %3 = vector.load %arg2[%c80, %c0_3] : memref<96x128xbf16, #tpu.memory_space<vmem>>, vector<1x128xbf16>
    %4 = arith.extf %3 : vector<1x128xbf16> to vector<1x128xf32>
    %c0_4 = arith.constant 0 : index
    %c0_5 = arith.constant 0 : index
    %c0_6 = arith.constant 0 : index
    %5 = vector.load %arg1[%c0_4, %c0_5, %c0_6] : memref<8x8x16xf32, #tpu.memory_space<vmem>>, vector<1x8x16xf32>
    %6 = vector.shape_cast %5 : vector<1x8x16xf32> to vector<8x16xf32>
    %c1 = arith.constant 1 : index
    %c0_7 = arith.constant 0 : index
    %c0_8 = arith.constant 0 : index
    %7 = vector.load %arg1[%c1, %c0_7, %c0_8] : memref<8x8x16xf32, #tpu.memory_space<vmem>>, vector<1x8x16xf32>
    %8 = vector.shape_cast %7 : vector<1x8x16xf32> to vector<8x16xf32>
    %c2 = arith.constant 2 : index
    %c0_9 = arith.constant 0 : index
    %c0_10 = arith.constant 0 : index
    %9 = vector.load %arg1[%c2, %c0_9, %c0_10] : memref<8x8x16xf32, #tpu.memory_space<vmem>>, vector<1x8x16xf32>
    %10 = vector.shape_cast %9 : vector<1x8x16xf32> to vector<8x16xf32>
    %c3 = arith.constant 3 : index
    %c0_11 = arith.constant 0 : index
    %c0_12 = arith.constant 0 : index
    %11 = vector.load %arg1[%c3, %c0_11, %c0_12] : memref<8x8x16xf32, #tpu.memory_space<vmem>>, vector<1x8x16xf32>
    %12 = vector.shape_cast %11 : vector<1x8x16xf32> to vector<8x16xf32>
    %c4 = arith.constant 4 : index
    %c0_13 = arith.constant 0 : index
    %c0_14 = arith.constant 0 : index
    %13 = vector.load %arg1[%c4, %c0_13, %c0_14] : memref<8x8x16xf32, #tpu.memory_space<vmem>>, vector<1x8x16xf32>
    %14 = vector.shape_cast %13 : vector<1x8x16xf32> to vector<8x16xf32>
    %c5 = arith.constant 5 : index
    %c0_15 = arith.constant 0 : index
    %c0_16 = arith.constant 0 : index
    %15 = vector.load %arg1[%c5, %c0_15, %c0_16] : memref<8x8x16xf32, #tpu.memory_space<vmem>>, vector<1x8x16xf32>
    %16 = vector.shape_cast %15 : vector<1x8x16xf32> to vector<8x16xf32>
    %c6 = arith.constant 6 : index
    %c0_17 = arith.constant 0 : index
    %c0_18 = arith.constant 0 : index
    %17 = vector.load %arg1[%c6, %c0_17, %c0_18] : memref<8x8x16xf32, #tpu.memory_space<vmem>>, vector<1x8x16xf32>
    %18 = vector.shape_cast %17 : vector<1x8x16xf32> to vector<8x16xf32>
    %c7 = arith.constant 7 : index
    %c0_19 = arith.constant 0 : index
    %c0_20 = arith.constant 0 : index
    %19 = vector.load %arg1[%c7, %c0_19, %c0_20] : memref<8x8x16xf32, #tpu.memory_space<vmem>>, vector<1x8x16xf32>
    %20 = vector.shape_cast %19 : vector<1x8x16xf32> to vector<8x16xf32>
    %21 = tpu.concatenate %6, %8, %10, %12, %14, %16, %18, %20 in 0 : vector<8x16xf32>, vector<8x16xf32>, vector<8x16xf32>, vector<8x16xf32>, vector<8x16xf32>, vector<8x16xf32>, vector<8x16xf32>, vector<8x16xf32> -> vector<64x16xf32>
    %22 = arith.truncf %21 : vector<64x16xf32> to vector<64x16xbf16>
    %cst = arith.constant dense<0.000000e+00> : vector<64x128xf32>
    %23 = tpu.matmul %22, %0, %cst {dimension_numbers = #tpu.dot_dimension_numbers<[1], [0], [0], [1], [0, 0, 1, 1], [], []>} : vector<64x16xbf16>, vector<16x128xbf16>, vector<64x128xf32> -> vector<64x128xf32>
    %cst_21 = arith.constant 0.000000e+00 : f32
    %24 = vector.broadcast %cst_21 : f32 to vector<8x32xf32>
    %cst_22 = arith.constant 0.000000e+00 : f32
    %25 = vector.broadcast %cst_22 : f32 to vector<8x32xf32>
    %26 = vector.extract_strided_slice %23 {offsets = [0, 0], sizes = [8, 128], strides = [1, 1]} : vector<64x128xf32> to vector<8x128xf32>
    %27 = arith.truncf %24 : vector<8x32xf32> to vector<8x32xbf16>
    %cst_23 = arith.constant dense<0.000000e+00> : vector<8x128xf32>
    %28 = tpu.matmul %27, %1, %cst_23 {dimension_numbers = #tpu.dot_dimension_numbers<[1], [0], [0], [1], [0, 0, 1, 1], [], []>} : vector<8x32xbf16>, vector<32x128xbf16>, vector<8x128xf32> -> vector<8x128xf32>
    %29 = arith.addf %26, %28 : vector<8x128xf32>
    %30 = arith.negf %29 : vector<8x128xf32>
    %31 = math.exp %30 : vector<8x128xf32>
    %cst_24 = arith.constant 1.000000e+00 : f32
    %32 = vector.broadcast %cst_24 : f32 to vector<8x128xf32>
    %33 = arith.addf %32, %31 : vector<8x128xf32>
    %34 = arith.divf %32, %33 : vector<8x128xf32>
    %35 = math.tanh %29 : vector<8x128xf32>
    %36 = vector.extract_strided_slice %34 {offsets = [0, 0], sizes = [8, 32], strides = [1, 1]} : vector<8x128xf32> to vector<8x32xf32>
    %37 = vector.extract_strided_slice %34 {offsets = [0, 32], sizes = [8, 32], strides = [1, 1]} : vector<8x128xf32> to vector<8x32xf32>
    %38 = vector.extract_strided_slice %35 {offsets = [0, 64], sizes = [8, 32], strides = [1, 1]} : vector<8x128xf32> to vector<8x32xf32>
    %39 = vector.extract_strided_slice %34 {offsets = [0, 96], sizes = [8, 32], strides = [1, 1]} : vector<8x128xf32> to vector<8x32xf32>
    %40 = arith.mulf %37, %25 : vector<8x32xf32>
    %41 = arith.mulf %36, %38 : vector<8x32xf32>
    %42 = arith.addf %40, %41 : vector<8x32xf32>
    %43 = math.tanh %42 : vector<8x32xf32>
    %44 = arith.mulf %39, %43 : vector<8x32xf32>
    %45 = vector.extract_strided_slice %23 {offsets = [8, 0], sizes = [8, 128], strides = [1, 1]} : vector<64x128xf32> to vector<8x128xf32>
    %46 = arith.truncf %44 : vector<8x32xf32> to vector<8x32xbf16>
    %cst_25 = arith.constant dense<0.000000e+00> : vector<8x128xf32>
    %47 = tpu.matmul %46, %1, %cst_25 {dimension_numbers = #tpu.dot_dimension_numbers<[1], [0], [0], [1], [0, 0, 1, 1], [], []>} : vector<8x32xbf16>, vector<32x128xbf16>, vector<8x128xf32> -> vector<8x128xf32>
    %48 = arith.addf %45, %47 : vector<8x128xf32>
    %49 = arith.negf %48 : vector<8x128xf32>
    %50 = math.exp %49 : vector<8x128xf32>
    %cst_26 = arith.constant 1.000000e+00 : f32
    %51 = vector.broadcast %cst_26 : f32 to vector<8x128xf32>
    %52 = arith.addf %51, %50 : vector<8x128xf32>
    %53 = arith.divf %51, %52 : vector<8x128xf32>
    %54 = math.tanh %48 : vector<8x128xf32>
    %55 = vector.extract_strided_slice %53 {offsets = [0, 0], sizes = [8, 32], strides = [1, 1]} : vector<8x128xf32> to vector<8x32xf32>
    %56 = vector.extract_strided_slice %53 {offsets = [0, 32], sizes = [8, 32], strides = [1, 1]} : vector<8x128xf32> to vector<8x32xf32>
    %57 = vector.extract_strided_slice %54 {offsets = [0, 64], sizes = [8, 32], strides = [1, 1]} : vector<8x128xf32> to vector<8x32xf32>
    %58 = vector.extract_strided_slice %53 {offsets = [0, 96], sizes = [8, 32], strides = [1, 1]} : vector<8x128xf32> to vector<8x32xf32>
    %59 = arith.mulf %56, %42 : vector<8x32xf32>
    %60 = arith.mulf %55, %57 : vector<8x32xf32>
    %61 = arith.addf %59, %60 : vector<8x32xf32>
    %62 = math.tanh %61 : vector<8x32xf32>
    %63 = arith.mulf %58, %62 : vector<8x32xf32>
    %64 = vector.extract_strided_slice %23 {offsets = [16, 0], sizes = [8, 128], strides = [1, 1]} : vector<64x128xf32> to vector<8x128xf32>
    %65 = arith.truncf %63 : vector<8x32xf32> to vector<8x32xbf16>
    %cst_27 = arith.constant dense<0.000000e+00> : vector<8x128xf32>
    %66 = tpu.matmul %65, %1, %cst_27 {dimension_numbers = #tpu.dot_dimension_numbers<[1], [0], [0], [1], [0, 0, 1, 1], [], []>} : vector<8x32xbf16>, vector<32x128xbf16>, vector<8x128xf32> -> vector<8x128xf32>
    %67 = arith.addf %64, %66 : vector<8x128xf32>
    %68 = arith.negf %67 : vector<8x128xf32>
    %69 = math.exp %68 : vector<8x128xf32>
    %cst_28 = arith.constant 1.000000e+00 : f32
    %70 = vector.broadcast %cst_28 : f32 to vector<8x128xf32>
    %71 = arith.addf %70, %69 : vector<8x128xf32>
    %72 = arith.divf %70, %71 : vector<8x128xf32>
    %73 = math.tanh %67 : vector<8x128xf32>
    %74 = vector.extract_strided_slice %72 {offsets = [0, 0], sizes = [8, 32], strides = [1, 1]} : vector<8x128xf32> to vector<8x32xf32>
    %75 = vector.extract_strided_slice %72 {offsets = [0, 32], sizes = [8, 32], strides = [1, 1]} : vector<8x128xf32> to vector<8x32xf32>
    %76 = vector.extract_strided_slice %73 {offsets = [0, 64], sizes = [8, 32], strides = [1, 1]} : vector<8x128xf32> to vector<8x32xf32>
    %77 = vector.extract_strided_slice %72 {offsets = [0, 96], sizes = [8, 32], strides = [1, 1]} : vector<8x128xf32> to vector<8x32xf32>
    %78 = arith.mulf %75, %61 : vector<8x32xf32>
    %79 = arith.mulf %74, %76 : vector<8x32xf32>
    %80 = arith.addf %78, %79 : vector<8x32xf32>
    %81 = math.tanh %80 : vector<8x32xf32>
    %82 = arith.mulf %77, %81 : vector<8x32xf32>
    %83 = vector.extract_strided_slice %23 {offsets = [24, 0], sizes = [8, 128], strides = [1, 1]} : vector<64x128xf32> to vector<8x128xf32>
    %84 = arith.truncf %82 : vector<8x32xf32> to vector<8x32xbf16>
    %cst_29 = arith.constant dense<0.000000e+00> : vector<8x128xf32>
    %85 = tpu.matmul %84, %1, %cst_29 {dimension_numbers = #tpu.dot_dimension_numbers<[1], [0], [0], [1], [0, 0, 1, 1], [], []>} : vector<8x32xbf16>, vector<32x128xbf16>, vector<8x128xf32> -> vector<8x128xf32>
    %86 = arith.addf %83, %85 : vector<8x128xf32>
    %87 = arith.negf %86 : vector<8x128xf32>
    %88 = math.exp %87 : vector<8x128xf32>
    %cst_30 = arith.constant 1.000000e+00 : f32
    %89 = vector.broadcast %cst_30 : f32 to vector<8x128xf32>
    %90 = arith.addf %89, %88 : vector<8x128xf32>
    %91 = arith.divf %89, %90 : vector<8x128xf32>
    %92 = math.tanh %86 : vector<8x128xf32>
    %93 = vector.extract_strided_slice %91 {offsets = [0, 0], sizes = [8, 32], strides = [1, 1]} : vector<8x128xf32> to vector<8x32xf32>
    %94 = vector.extract_strided_slice %91 {offsets = [0, 32], sizes = [8, 32], strides = [1, 1]} : vector<8x128xf32> to vector<8x32xf32>
    %95 = vector.extract_strided_slice %92 {offsets = [0, 64], sizes = [8, 32], strides = [1, 1]} : vector<8x128xf32> to vector<8x32xf32>
    %96 = vector.extract_strided_slice %91 {offsets = [0, 96], sizes = [8, 32], strides = [1, 1]} : vector<8x128xf32> to vector<8x32xf32>
    %97 = arith.mulf %94, %80 : vector<8x32xf32>
    %98 = arith.mulf %93, %95 : vector<8x32xf32>
    %99 = arith.addf %97, %98 : vector<8x32xf32>
    %100 = math.tanh %99 : vector<8x32xf32>
    %101 = arith.mulf %96, %100 : vector<8x32xf32>
    %102 = vector.extract_strided_slice %23 {offsets = [32, 0], sizes = [8, 128], strides = [1, 1]} : vector<64x128xf32> to vector<8x128xf32>
    %103 = arith.truncf %101 : vector<8x32xf32> to vector<8x32xbf16>
    %cst_31 = arith.constant dense<0.000000e+00> : vector<8x128xf32>
    %104 = tpu.matmul %103, %1, %cst_31 {dimension_numbers = #tpu.dot_dimension_numbers<[1], [0], [0], [1], [0, 0, 1, 1], [], []>} : vector<8x32xbf16>, vector<32x128xbf16>, vector<8x128xf32> -> vector<8x128xf32>
    %105 = arith.addf %102, %104 : vector<8x128xf32>
    %106 = arith.negf %105 : vector<8x128xf32>
    %107 = math.exp %106 : vector<8x128xf32>
    %cst_32 = arith.constant 1.000000e+00 : f32
    %108 = vector.broadcast %cst_32 : f32 to vector<8x128xf32>
    %109 = arith.addf %108, %107 : vector<8x128xf32>
    %110 = arith.divf %108, %109 : vector<8x128xf32>
    %111 = math.tanh %105 : vector<8x128xf32>
    %112 = vector.extract_strided_slice %110 {offsets = [0, 0], sizes = [8, 32], strides = [1, 1]} : vector<8x128xf32> to vector<8x32xf32>
    %113 = vector.extract_strided_slice %110 {offsets = [0, 32], sizes = [8, 32], strides = [1, 1]} : vector<8x128xf32> to vector<8x32xf32>
    %114 = vector.extract_strided_slice %111 {offsets = [0, 64], sizes = [8, 32], strides = [1, 1]} : vector<8x128xf32> to vector<8x32xf32>
    %115 = vector.extract_strided_slice %110 {offsets = [0, 96], sizes = [8, 32], strides = [1, 1]} : vector<8x128xf32> to vector<8x32xf32>
    %116 = arith.mulf %113, %99 : vector<8x32xf32>
    %117 = arith.mulf %112, %114 : vector<8x32xf32>
    %118 = arith.addf %116, %117 : vector<8x32xf32>
    %119 = math.tanh %118 : vector<8x32xf32>
    %120 = arith.mulf %115, %119 : vector<8x32xf32>
    %121 = vector.extract_strided_slice %23 {offsets = [40, 0], sizes = [8, 128], strides = [1, 1]} : vector<64x128xf32> to vector<8x128xf32>
    %122 = arith.truncf %120 : vector<8x32xf32> to vector<8x32xbf16>
    %cst_33 = arith.constant dense<0.000000e+00> : vector<8x128xf32>
    %123 = tpu.matmul %122, %1, %cst_33 {dimension_numbers = #tpu.dot_dimension_numbers<[1], [0], [0], [1], [0, 0, 1, 1], [], []>} : vector<8x32xbf16>, vector<32x128xbf16>, vector<8x128xf32> -> vector<8x128xf32>
    %124 = arith.addf %121, %123 : vector<8x128xf32>
    %125 = arith.negf %124 : vector<8x128xf32>
    %126 = math.exp %125 : vector<8x128xf32>
    %cst_34 = arith.constant 1.000000e+00 : f32
    %127 = vector.broadcast %cst_34 : f32 to vector<8x128xf32>
    %128 = arith.addf %127, %126 : vector<8x128xf32>
    %129 = arith.divf %127, %128 : vector<8x128xf32>
    %130 = math.tanh %124 : vector<8x128xf32>
    %131 = vector.extract_strided_slice %129 {offsets = [0, 0], sizes = [8, 32], strides = [1, 1]} : vector<8x128xf32> to vector<8x32xf32>
    %132 = vector.extract_strided_slice %129 {offsets = [0, 32], sizes = [8, 32], strides = [1, 1]} : vector<8x128xf32> to vector<8x32xf32>
    %133 = vector.extract_strided_slice %130 {offsets = [0, 64], sizes = [8, 32], strides = [1, 1]} : vector<8x128xf32> to vector<8x32xf32>
    %134 = vector.extract_strided_slice %129 {offsets = [0, 96], sizes = [8, 32], strides = [1, 1]} : vector<8x128xf32> to vector<8x32xf32>
    %135 = arith.mulf %132, %118 : vector<8x32xf32>
    %136 = arith.mulf %131, %133 : vector<8x32xf32>
    %137 = arith.addf %135, %136 : vector<8x32xf32>
    %138 = math.tanh %137 : vector<8x32xf32>
    %139 = arith.mulf %134, %138 : vector<8x32xf32>
    %140 = vector.extract_strided_slice %23 {offsets = [48, 0], sizes = [8, 128], strides = [1, 1]} : vector<64x128xf32> to vector<8x128xf32>
    %141 = arith.truncf %139 : vector<8x32xf32> to vector<8x32xbf16>
    %cst_35 = arith.constant dense<0.000000e+00> : vector<8x128xf32>
    %142 = tpu.matmul %141, %1, %cst_35 {dimension_numbers = #tpu.dot_dimension_numbers<[1], [0], [0], [1], [0, 0, 1, 1], [], []>} : vector<8x32xbf16>, vector<32x128xbf16>, vector<8x128xf32> -> vector<8x128xf32>
    %143 = arith.addf %140, %142 : vector<8x128xf32>
    %144 = arith.negf %143 : vector<8x128xf32>
    %145 = math.exp %144 : vector<8x128xf32>
    %cst_36 = arith.constant 1.000000e+00 : f32
    %146 = vector.broadcast %cst_36 : f32 to vector<8x128xf32>
    %147 = arith.addf %146, %145 : vector<8x128xf32>
    %148 = arith.divf %146, %147 : vector<8x128xf32>
    %149 = math.tanh %143 : vector<8x128xf32>
    %150 = vector.extract_strided_slice %148 {offsets = [0, 0], sizes = [8, 32], strides = [1, 1]} : vector<8x128xf32> to vector<8x32xf32>
    %151 = vector.extract_strided_slice %148 {offsets = [0, 32], sizes = [8, 32], strides = [1, 1]} : vector<8x128xf32> to vector<8x32xf32>
    %152 = vector.extract_strided_slice %149 {offsets = [0, 64], sizes = [8, 32], strides = [1, 1]} : vector<8x128xf32> to vector<8x32xf32>
    %153 = vector.extract_strided_slice %148 {offsets = [0, 96], sizes = [8, 32], strides = [1, 1]} : vector<8x128xf32> to vector<8x32xf32>
    %154 = arith.mulf %151, %137 : vector<8x32xf32>
    %155 = arith.mulf %150, %152 : vector<8x32xf32>
    %156 = arith.addf %154, %155 : vector<8x32xf32>
    %157 = math.tanh %156 : vector<8x32xf32>
    %158 = arith.mulf %153, %157 : vector<8x32xf32>
    %159 = vector.extract_strided_slice %23 {offsets = [56, 0], sizes = [8, 128], strides = [1, 1]} : vector<64x128xf32> to vector<8x128xf32>
    %160 = arith.truncf %158 : vector<8x32xf32> to vector<8x32xbf16>
    %cst_37 = arith.constant dense<0.000000e+00> : vector<8x128xf32>
    %161 = tpu.matmul %160, %1, %cst_37 {dimension_numbers = #tpu.dot_dimension_numbers<[1], [0], [0], [1], [0, 0, 1, 1], [], []>} : vector<8x32xbf16>, vector<32x128xbf16>, vector<8x128xf32> -> vector<8x128xf32>
    %162 = arith.addf %159, %161 : vector<8x128xf32>
    %163 = arith.negf %162 : vector<8x128xf32>
    %164 = math.exp %163 : vector<8x128xf32>
    %cst_38 = arith.constant 1.000000e+00 : f32
    %165 = vector.broadcast %cst_38 : f32 to vector<8x128xf32>
    %166 = arith.addf %165, %164 : vector<8x128xf32>
    %167 = arith.divf %165, %166 : vector<8x128xf32>
    %168 = math.tanh %162 : vector<8x128xf32>
    %169 = vector.extract_strided_slice %167 {offsets = [0, 0], sizes = [8, 32], strides = [1, 1]} : vector<8x128xf32> to vector<8x32xf32>
    %170 = vector.extract_strided_slice %167 {offsets = [0, 32], sizes = [8, 32], strides = [1, 1]} : vector<8x128xf32> to vector<8x32xf32>
    %171 = vector.extract_strided_slice %168 {offsets = [0, 64], sizes = [8, 32], strides = [1, 1]} : vector<8x128xf32> to vector<8x32xf32>
    %172 = vector.extract_strided_slice %167 {offsets = [0, 96], sizes = [8, 32], strides = [1, 1]} : vector<8x128xf32> to vector<8x32xf32>
    %173 = arith.mulf %170, %156 : vector<8x32xf32>
    %174 = arith.mulf %169, %171 : vector<8x32xf32>
    %175 = arith.addf %173, %174 : vector<8x32xf32>
    %176 = math.tanh %175 : vector<8x32xf32>
    %177 = arith.mulf %172, %176 : vector<8x32xf32>
    %178 = tpu.concatenate %44, %63, %82, %101, %120, %139, %158, %177 in 0 : vector<8x32xf32>, vector<8x32xf32>, vector<8x32xf32>, vector<8x32xf32>, vector<8x32xf32>, vector<8x32xf32>, vector<8x32xf32>, vector<8x32xf32> -> vector<64x32xf32>
    %179 = arith.truncf %178 : vector<64x32xf32> to vector<64x32xbf16>
    %cst_39 = arith.constant dense<0.000000e+00> : vector<64x128xf32>
    %180 = tpu.matmul %179, %2, %cst_39 {dimension_numbers = #tpu.dot_dimension_numbers<[1], [0], [0], [1], [0, 0, 1, 1], [], []>} : vector<64x32xbf16>, vector<32x128xbf16>, vector<64x128xf32> -> vector<64x128xf32>
    %181 = vector.broadcast %4 : vector<1x128xf32> to vector<64x128xf32>
    %182 = arith.addf %180, %181 : vector<64x128xf32>
    %183 = math.tanh %182 : vector<64x128xf32>
    %cst_40 = arith.constant 2.000000e+00 : f32
    %184 = vector.broadcast %cst_40 : f32 to vector<64x128xf32>
    %185 = arith.mulf %183, %184 : vector<64x128xf32>
    %186 = vector.extract_strided_slice %185 {offsets = [0, 0], sizes = [8, 128], strides = [1, 1]} : vector<64x128xf32> to vector<8x128xf32>
    %c0_41 = arith.constant 0 : index
    %c0_42 = arith.constant 0 : index
    %c0_43 = arith.constant 0 : index
    %187 = vector.load %arg3[%c0_41, %c0_42, %c0_43] : memref<8x8x128xf32, #tpu.memory_space<vmem>>, vector<1x8x128xf32>
    %188 = vector.shape_cast %187 : vector<1x8x128xf32> to vector<8x128xf32>
    %189 = vector.shape_cast %186 : vector<8x128xf32> to vector<1x8x128xf32>
    tpu.vector_store %arg3[%c0_41, %c0_42, %c0_43], %189 {strides = array<i32>} : memref<8x8x128xf32, #tpu.memory_space<vmem>>, vector<1x8x128xf32>,
    %190 = vector.extract_strided_slice %185 {offsets = [8, 0], sizes = [8, 128], strides = [1, 1]} : vector<64x128xf32> to vector<8x128xf32>
    %c1_44 = arith.constant 1 : index
    %c0_45 = arith.constant 0 : index
    %c0_46 = arith.constant 0 : index
    %191 = vector.load %arg3[%c1_44, %c0_45, %c0_46] : memref<8x8x128xf32, #tpu.memory_space<vmem>>, vector<1x8x128xf32>
    %192 = vector.shape_cast %191 : vector<1x8x128xf32> to vector<8x128xf32>
    %193 = vector.shape_cast %190 : vector<8x128xf32> to vector<1x8x128xf32>
    tpu.vector_store %arg3[%c1_44, %c0_45, %c0_46], %193 {strides = array<i32>} : memref<8x8x128xf32, #tpu.memory_space<vmem>>, vector<1x8x128xf32>,
    %194 = vector.extract_strided_slice %185 {offsets = [16, 0], sizes = [8, 128], strides = [1, 1]} : vector<64x128xf32> to vector<8x128xf32>
    %c2_47 = arith.constant 2 : index
    %c0_48 = arith.constant 0 : index
    %c0_49 = arith.constant 0 : index
    %195 = vector.load %arg3[%c2_47, %c0_48, %c0_49] : memref<8x8x128xf32, #tpu.memory_space<vmem>>, vector<1x8x128xf32>
    %196 = vector.shape_cast %195 : vector<1x8x128xf32> to vector<8x128xf32>
    %197 = vector.shape_cast %194 : vector<8x128xf32> to vector<1x8x128xf32>
    tpu.vector_store %arg3[%c2_47, %c0_48, %c0_49], %197 {strides = array<i32>} : memref<8x8x128xf32, #tpu.memory_space<vmem>>, vector<1x8x128xf32>,
    %198 = vector.extract_strided_slice %185 {offsets = [24, 0], sizes = [8, 128], strides = [1, 1]} : vector<64x128xf32> to vector<8x128xf32>
    %c3_50 = arith.constant 3 : index
    %c0_51 = arith.constant 0 : index
    %c0_52 = arith.constant 0 : index
    %199 = vector.load %arg3[%c3_50, %c0_51, %c0_52] : memref<8x8x128xf32, #tpu.memory_space<vmem>>, vector<1x8x128xf32>
    %200 = vector.shape_cast %199 : vector<1x8x128xf32> to vector<8x128xf32>
    %201 = vector.shape_cast %198 : vector<8x128xf32> to vector<1x8x128xf32>
    tpu.vector_store %arg3[%c3_50, %c0_51, %c0_52], %201 {strides = array<i32>} : memref<8x8x128xf32, #tpu.memory_space<vmem>>, vector<1x8x128xf32>,
    %202 = vector.extract_strided_slice %185 {offsets = [32, 0], sizes = [8, 128], strides = [1, 1]} : vector<64x128xf32> to vector<8x128xf32>
    %c4_53 = arith.constant 4 : index
    %c0_54 = arith.constant 0 : index
    %c0_55 = arith.constant 0 : index
    %203 = vector.load %arg3[%c4_53, %c0_54, %c0_55] : memref<8x8x128xf32, #tpu.memory_space<vmem>>, vector<1x8x128xf32>
    %204 = vector.shape_cast %203 : vector<1x8x128xf32> to vector<8x128xf32>
    %205 = vector.shape_cast %202 : vector<8x128xf32> to vector<1x8x128xf32>
    tpu.vector_store %arg3[%c4_53, %c0_54, %c0_55], %205 {strides = array<i32>} : memref<8x8x128xf32, #tpu.memory_space<vmem>>, vector<1x8x128xf32>,
    %206 = vector.extract_strided_slice %185 {offsets = [40, 0], sizes = [8, 128], strides = [1, 1]} : vector<64x128xf32> to vector<8x128xf32>
    %c5_56 = arith.constant 5 : index
    %c0_57 = arith.constant 0 : index
    %c0_58 = arith.constant 0 : index
    %207 = vector.load %arg3[%c5_56, %c0_57, %c0_58] : memref<8x8x128xf32, #tpu.memory_space<vmem>>, vector<1x8x128xf32>
    %208 = vector.shape_cast %207 : vector<1x8x128xf32> to vector<8x128xf32>
    %209 = vector.shape_cast %206 : vector<8x128xf32> to vector<1x8x128xf32>
    tpu.vector_store %arg3[%c5_56, %c0_57, %c0_58], %209 {strides = array<i32>} : memref<8x8x128xf32, #tpu.memory_space<vmem>>, vector<1x8x128xf32>,
    %210 = vector.extract_strided_slice %185 {offsets = [48, 0], sizes = [8, 128], strides = [1, 1]} : vector<64x128xf32> to vector<8x128xf32>
    %c6_59 = arith.constant 6 : index
    %c0_60 = arith.constant 0 : index
    %c0_61 = arith.constant 0 : index
    %211 = vector.load %arg3[%c6_59, %c0_60, %c0_61] : memref<8x8x128xf32, #tpu.memory_space<vmem>>, vector<1x8x128xf32>
    %212 = vector.shape_cast %211 : vector<1x8x128xf32> to vector<8x128xf32>
    %213 = vector.shape_cast %210 : vector<8x128xf32> to vector<1x8x128xf32>
    tpu.vector_store %arg3[%c6_59, %c0_60, %c0_61], %213 {strides = array<i32>} : memref<8x8x128xf32, #tpu.memory_space<vmem>>, vector<1x8x128xf32>,
    %214 = vector.extract_strided_slice %185 {offsets = [56, 0], sizes = [8, 128], strides = [1, 1]} : vector<64x128xf32> to vector<8x128xf32>
    %c7_62 = arith.constant 7 : index
    %c0_63 = arith.constant 0 : index
    %c0_64 = arith.constant 0 : index
    %215 = vector.load %arg3[%c7_62, %c0_63, %c0_64] : memref<8x8x128xf32, #tpu.memory_space<vmem>>, vector<1x8x128xf32>
    %216 = vector.shape_cast %215 : vector<1x8x128xf32> to vector<8x128xf32>
    %217 = vector.shape_cast %214 : vector<8x128xf32> to vector<1x8x128xf32>
    tpu.vector_store %arg3[%c7_62, %c0_63, %c0_64], %217 {strides = array<i32>} : memref<8x8x128xf32, #tpu.memory_space<vmem>>, vector<1x8x128xf32>,
    return
  }
  func.func @transform_0(%arg0: i32) -> (i32, i32, i32) {
    %c0_i32 = arith.constant 0 : i32
    %c0_i32_0 = arith.constant 0 : i32
    %c0_i32_1 = arith.constant 0 : i32
    return %c0_i32, %arg0, %c0_i32_0 : i32, i32, i32
  }
  func.func @transform_1(%arg0: i32) -> (i32, i32) {
    %c0_i32 = arith.constant 0 : i32
    %c0_i32_0 = arith.constant 0 : i32
    %c0_i32_1 = arith.constant 0 : i32
    return %c0_i32, %c0_i32_0 : i32, i32
  }
  func.func @transform_2(%arg0: i32) -> (i32, i32, i32) {
    %c0_i32 = arith.constant 0 : i32
    %c0_i32_0 = arith.constant 0 : i32
    %c0_i32_1 = arith.constant 0 : i32
    return %c0_i32, %arg0, %c0_i32_0 : i32, i32, i32
  }
}

</mosaic_0001>

<llo_original>
// kernel: actor_net_forward.1
$region0: #{actor_net_forward.1}
  #allocation0 [shape = 'u32[]', space=smem, size = 0x4, offset = 0x4, fixed_abs, tag = 'smem constant byte address 0x4 - core index']
  #allocation1 [shape = 'u32[144,128]{1,0:T(1,128)}', space=vmem, size = 0x12000, scoped, tag = 'internal scratch']
  %s0 = inlined_call_operand.vmem [shape: f32[8,16,16], index: 0, kind: input, shape index: {}]
  %s1 = inlined_call_operand.vmem [shape: bf16[96,128], index: 1, kind: input, shape index: {}]
  %s2 = inlined_call_operand.vmem [shape: f32[8,16,128], index: 2, kind: output, shape index: {}]
  %s3 = sld [smem:[#allocation0]]
  $region113: #{actor_net_forward.1} parent=0
    _
  %s5 = ssub.s32 1, %s3
  %s6 = scalar_select 0, %s5, %s3
  $region1: #{actor_net_forward.1} parent=0
    #allocation2 [shape = 'u8[65536]{0}', space=vmem, size = 0x10000, scoped, tag = 'input window, operand 0']
    #allocation3 [shape = 'u8[65536]{0}', space=vmem, size = 0x10000, scoped, tag = 'output window, operand 0']
    loop: start=0, step=1, limit=4
    $region2: #{actor_net_forward.1} parent=1 // loop_pre_header
      _
    $region3: #{actor_net_forward.1} parent=1 // loop_header
      %s8 = sphi 0, %s12
      %p9 = scmp.ge.s32.totalorder %s8, 4
      %s18 = sphi 0, %s20
      %s21 = sphi 0, %s18
      %s22 = sphi 0, %s21
      %s38 = sphi 0, %s22
      %s42 = sphi 0, %s42
      %s44 = sphi 0, %s42
      %s45 = sphi 0, %s44
      %s59 = sphi 0, %s45
      %s65 = sphi 0, %s67
      %s68 = sphi 0, %s65
      %s69 = sphi 0, %s68
      %s85 = sphi 0, %s69
    $region4: #{actor_net_forward.1} parent=1 // loop_header_branch
      %11 = sbr.rel (%p9) target = $region8
    $region5: #{actor_net_forward.1} parent=1 // loop_body
      %s13 = ssub.s32 %s8, 1
      %s14 = ssub.s32 %s8, 2
      %s15 = sadd.s32 %s8, 1
      %s16 = ssub.s32 %s8, %s15
      %p17 = scmp.eq.s32.totalorder %s16, 0
      %s19 = sadd.s32 %s18, 1
      %s20 = scalar_select %p17, %s18, %s19
      %p23 = pneg %p17
      %p24 = scmp.eq.s32.totalorder %s8, 1
      %p25 = por %p23, %p24
      %p26 = scmp.ne.s32.totalorder %s18, %s21
      %p27 = scmp.eq.s32.totalorder %s8, 0
      %p28 = por %p26, %p27
      %p29 = scmp.ne.s32.totalorder %s18, %s21
      %p30 = scmp.eq.s32.totalorder %s13, 1
      %p31 = por %p29, %p30
      %p32 = scmp.ne.s32.totalorder %s21, %s22
      %p33 = scmp.eq.s32.totalorder %s13, 0
      %p34 = por %p32, %p33
      %p35 = scmp.ne.s32.totalorder %s21, %s22
      %p36 = scmp.eq.s32.totalorder %s14, 1
      %p37 = por %p35, %p36
      %p39 = scmp.ne.s32.totalorder %s22, %s38
      %p40 = scmp.eq.s32.totalorder %s14, 0
      %p41 = por %p39, %p40
      %s43 = sadd.s32 %s42, 1
      %p46 = scmp.eq.s32.totalorder %s8, 1
      %p47 = scmp.ne.s32.totalorder %s42, %s44
      %p48 = scmp.eq.s32.totalorder %s8, 0
      %p49 = por %p47, %p48
      %p50 = scmp.ne.s32.totalorder %s42, %s44
      %p51 = scmp.eq.s32.totalorder %s13, 1
      %p52 = por %p50, %p51
      %p53 = scmp.ne.s32.totalorder %s44, %s45
      %p54 = scmp.eq.s32.totalorder %s13, 0
      %p55 = por %p53, %p54
      %p56 = scmp.ne.s32.totalorder %s44, %s45
      %p57 = scmp.eq.s32.totalorder %s14, 1
      %p58 = por %p56, %p57
      %p60 = scmp.ne.s32.totalorder %s45, %s59
      %p61 = scmp.eq.s32.totalorder %s14, 0
      %p62 = por %p60, %p61
      %s63 = ssub.s32 %s8, %s15
      %p64 = scmp.eq.s32.totalorder %s63, 0
      %s66 = sadd.s32 %s65, 1
      %s67 = scalar_select %p64, %s65, %s66
      %p70 = pneg %p64
      %p71 = scmp.eq.s32.totalorder %s8, 1
      %p72 = por %p70, %p71
      %p73 = scmp.ne.s32.totalorder %s65, %s68
      %p74 = scmp.eq.s32.totalorder %s8, 0
      %p75 = por %p73, %p74
      %p76 = scmp.ne.s32.totalorder %s65, %s68
      %p77 = scmp.eq.s32.totalorder %s13, 1
      %p78 = por %p76, %p77
      %p79 = scmp.ne.s32.totalorder %s68, %s69
      %p80 = scmp.eq.s32.totalorder %s13, 0
      %p81 = por %p79, %p80
      %p82 = scmp.ne.s32.totalorder %s68, %s69
      %p83 = scmp.eq.s32.totalorder %s14, 1
      %p84 = por %p82, %p83
      %p86 = scmp.ne.s32.totalorder %s69, %s85
      %p87 = scmp.eq.s32.totalorder %s14, 0
      %p88 = por %p86, %p87
      %p89 = scmp.le.s32.totalorder 1, %s8
      %p90 = scmp.lt.s32.totalorder %s8, 3
      %p91 = pnand %p89, %p90
      %p92 = pneg %p91
      // Predicated region
      $region9: #{actor_net_forward.1} parent=5 // pred_check
        _
      $region10: #{actor_net_forward.1} parent=5 // pred_check_branch
        %94 = sbr.rel (%p91) target = $region12
      $region11: #{actor_net_forward.1} parent=5 // pred_region
        %s95 = ssub.s32 %s8, 1
        // Predicated region
        $region13: #{actor_net_forward.1} parent=11 // pred_check
          %p96 = pneg %p55
        $region14: #{actor_net_forward.1} parent=11 // pred_check_branch
          %98 = sbr.rel (%p96) target = $region16
        $region15: #{actor_net_forward.1} parent=11 // pred_region
          _
        $region16: #{actor_net_forward.1} parent=11 // pred_fallthru
          _
      $region12: #{actor_net_forward.1} parent=5 // pred_fallthru
        _
      %p99 = scmp.lt.s32.totalorder %s8, 2
      // Predicated region
      $region17: #{actor_net_forward.1} parent=5 // pred_check
        %p100 = pneg %p99
      $region18: #{actor_net_forward.1} parent=5 // pred_check_branch
        %102 = sbr.rel (%p100) target = $region20
      $region19: #{actor_net_forward.1} parent=5 // pred_region
        // Predicated region
        $region21: #{actor_net_forward.1} parent=19 // pred_check
          %p103 = pneg %p28
        $region22: #{actor_net_forward.1} parent=19 // pred_check_branch
          %105 = sbr.rel (%p103) target = $region24
        $region23: #{actor_net_forward.1} parent=19 // pred_region
          %s106 = sand.u32 %s18, 1
          %s107 = sand.u32 %s18, 1
          %s108 = smul.addr %s107, 64
          %s109 = scalar_lea.vmem [#allocation2], %s108
          %s110 = smul.addr %s8, 8
          %s111 = scalar_lea.vmem %s0, %s110
          // Predicated region
          $region25: #{actor_net_forward.1} parent=23 // pred_check
            _
          $region26: #{actor_net_forward.1} parent=23 // pred_check_branch
            %113 = sbr.rel (0) target = $region28
          $region27: #{actor_net_forward.1} parent=23 // pred_region
            // Predicated region
            $region29: #{actor_net_forward.1} parent=27 // pred_check
              _
            $region30: #{actor_net_forward.1} parent=27 // pred_check_branch
              %115 = sbr.rel (0) target = $region32
            $region31: #{actor_net_forward.1} parent=27 // pred_region
              // Predicated region
              $region44: #{actor_net_forward.1} parent=31 // pred_check
                _
              $region45: #{actor_net_forward.1} parent=31 // pred_check_branch
                %145 = sbr.rel (0) target = $region47
              $region46: #{actor_net_forward.1} parent=31 // pred_region
                loop: start=0, step=1, limit=1
                $region48: #{actor_net_forward.1} parent=46 // loop_pre_header
                  _
                $region49: #{actor_net_forward.1} parent=46 // loop_header
                  %s147 = sphi 0, %s151
                  %p148 = scmp.ge.s32.totalorder %s147, 1
                  %s152 = sphi %s111, %s111
                  %s153 = sphi %s109, %s109
                $region50: #{actor_net_forward.1} parent=46 // loop_header_branch
                  %150 = sbr.rel (%p148) target = $region54
                $region51: #{actor_net_forward.1} parent=46 // loop_body
                  %v154 = vld [vmem:[%s152] sm:$0xff]
                  %155 = vst [vmem:[%s153] sm:$0xff] %v154
                  %v156 = vld [vmem:[%s152 + $0x10] sm:$0xff]
                  %157 = vst [vmem:[%s153 + $0x8] sm:$0xff] %v156
                  %v158 = vld [vmem:[%s152 + $0x20] sm:$0xff]
                  %159 = vst [vmem:[%s153 + $0x10] sm:$0xff] %v158
                  %v160 = vld [vmem:[%s152 + $0x30] sm:$0xff]
                  %161 = vst [vmem:[%s153 + $0x18] sm:$0xff] %v160
                  %v162 = vld [vmem:[%s152 + $0x40] sm:$0xff]
                  %163 = vst [vmem:[%s153 + $0x20] sm:$0xff] %v162
                  %v164 = vld [vmem:[%s152 + $0x50] sm:$0xff]
                  %165 = vst [vmem:[%s153 + $0x28] sm:$0xff] %v164
                  %v166 = vld [vmem:[%s152 + $0x60] sm:$0xff]
                  %167 = vst [vmem:[%s153 + $0x30] sm:$0xff] %v166
                  %v168 = vld [vmem:[%s152 + $0x70] sm:$0xff]
                  %169 = vst [vmem:[%s153 + $0x38] sm:$0xff] %v168
                $region52: #{actor_net_forward.1} parent=46 // loop_footer
                  %s151 = sadd.s32 1, %s147
                $region53: #{actor_net_forward.1} parent=46 // loop_footer_branch
                  %146 = sbr.rel target = $region49
                $region54: #{actor_net_forward.1} parent=46 // loop_exit
                  _
              $region47: #{actor_net_forward.1} parent=31 // pred_fallthru
                _
              // Predicated region
              $region55: #{actor_net_forward.1} parent=31 // pred_check
                _
              $region56: #{actor_net_forward.1} parent=31 // pred_check_branch
                %171 = sbr.rel target = $region58
              $region57: #{actor_net_forward.1} parent=31 // pred_region
                _
              $region58: #{actor_net_forward.1} parent=31 // pred_fallthru
                _
            $region32: #{actor_net_forward.1} parent=27 // pred_fallthru
              _
            // Predicated region
            $region33: #{actor_net_forward.1} parent=27 // pred_check
              _
            $region34: #{actor_net_forward.1} parent=27 // pred_check_branch
              %117 = sbr.rel target = $region36
            $region35: #{actor_net_forward.1} parent=27 // pred_region
              %s119 = ssub.s32 256, 1
              loop: start=0, step=1, limit=1
              $region37: #{actor_net_forward.1} parent=35 // loop_pre_header
                _
              $region38: #{actor_net_forward.1} parent=35 // loop_header
                %s121 = sphi 0, %s125
                %p122 = scmp.ge.s32.totalorder %s121, 1
                %s126 = sphi %s111, %s111
                %s127 = sphi %s109, %s109
              $region39: #{actor_net_forward.1} parent=35 // loop_header_branch
                %124 = sbr.rel (%p122) target = $region43
              $region40: #{actor_net_forward.1} parent=35 // loop_body
                %v128 = vld [vmem:[%s126] sm:%s119]
                %129 = vst [vmem:[%s127] sm:%s119] %v128
                %v130 = vld [vmem:[%s126 + $0x10] sm:%s119]
                %131 = vst [vmem:[%s127 + $0x8] sm:%s119] %v130
                %v132 = vld [vmem:[%s126 + $0x20] sm:%s119]
                %133 = vst [vmem:[%s127 + $0x10] sm:%s119] %v132
                %v134 = vld [vmem:[%s126 + $0x30] sm:%s119]
                %135 = vst [vmem:[%s127 + $0x18] sm:%s119] %v134
                %v136 = vld [vmem:[%s126 + $0x40] sm:%s119]
                %137 = vst [vmem:[%s127 + $0x20] sm:%s119] %v136
                %v138 = vld [vmem:[%s126 + $0x50] sm:%s119]
                %139 = vst [vmem:[%s127 + $0x28] sm:%s119] %v138
                %v140 = vld [vmem:[%s126 + $0x60] sm:%s119]
                %141 = vst [vmem:[%s127 + $0x30] sm:%s119] %v140
                %v142 = vld [vmem:[%s126 + $0x70] sm:%s119]
                %143 = vst [vmem:[%s127 + $0x38] sm:%s119] %v142
              $region41: #{actor_net_forward.1} parent=35 // loop_footer
                %s125 = sadd.s32 1, %s121
              $region42: #{actor_net_forward.1} parent=35 // loop_footer_branch
                %120 = sbr.rel target = $region38
              $region43: #{actor_net_forward.1} parent=35 // loop_exit
                _
            $region36: #{actor_net_forward.1} parent=27 // pred_fallthru
              _
          $region28: #{actor_net_forward.1} parent=23 // pred_fallthru
            _
          %172 = vnop
        $region24: #{actor_net_forward.1} parent=19 // pred_fallthru
          _
      $region20: #{actor_net_forward.1} parent=5 // pred_fallthru
        _
      %p173 = scmp.le.s32.totalorder 1, %s8
      %p174 = scmp.lt.s32.totalorder %s8, 3
      %p175 = pnand %p173, %p174
      %p176 = pneg %p175
      // Predicated region
      $region59: #{actor_net_forward.1} parent=5 // pred_check
        _
      $region60: #{actor_net_forward.1} parent=5 // pred_check_branch
        %178 = sbr.rel (%p175) target = $region62
      $region61: #{actor_net_forward.1} parent=5 // pred_region
        %s179 = ssub.s32 %s8, 1
        %s180 = sand.u32 %s21, 1
        %s181 = sand.u32 %s21, 1
        %s182 = smul.addr %s181, 64
        %s183 = scalar_lea.vmem [#allocation2], %s182
        // Predicated region
        $region63: #{actor_net_forward.1} parent=61 // pred_check
          %p184 = pneg %p34
        $region64: #{actor_net_forward.1} parent=61 // pred_check_branch
          %186 = sbr.rel (%p184) target = $region66
        $region65: #{actor_net_forward.1} parent=61 // pred_region
          _
        $region66: #{actor_net_forward.1} parent=61 // pred_fallthru
          _
        %s187 = sand.u32 %s21, 1
        %s188 = sand.u32 %s21, 1
        %s189 = smul.addr %s188, 64
        %s190 = scalar_lea.vmem [#allocation2], %s189
        %p191 = pneg %p34
        %p192 = pneg %p31
        %p193 = pneg %p55
        %p194 = pneg %p52
        %p195 = pneg %p81
        %p196 = pneg %p78
        %s197 = sand.u32 %s68, 1
        %s198 = sand.u32 %s68, 1
        %s199 = smul.addr %s198, 64
        %s200 = scalar_lea.vmem [#allocation3], %s199
        %v202 = vld [vmem:[%s1] sm:$0xf]
        %v203 = vld [vmem:[%s1 + $0x4] sm:$0xf]
        %v204 = vld [vmem:[%s1 + $0x8] sm:$0xf]
        %v205 = vld [vmem:[%s1 + $0xc] sm:$0xf]
        %v206 = vld [vmem:[%s1 + $0x10] sm:$0xf]
        %v207 = vld [vmem:[%s1 + $0x14] sm:$0xf]
        %v208 = vld [vmem:[%s1 + $0x18] sm:$0xf]
        %v209 = vld [vmem:[%s1 + $0x1c] sm:$0xf]
        %v210 = vld [vmem:[%s1 + $0x20] sm:$0xf]
        %v211 = vld [vmem:[%s1 + $0x24] sm:$0xf]
        %v212 = vld [vmem:[%s1 + $0x28] sm:$0x1]
        %v213 = vunpack.c.l.bf16 %v212
        %v214 = vld [vmem:[%s183] sm:$0xff]
        %s215 = scalar_lea.vmem %s183, 8 [#allocation2]
        %v216 = vld [vmem:[%s215] sm:$0xff]
        %s217 = scalar_lea.vmem %s183, 16 [#allocation2]
        %v218 = vld [vmem:[%s217] sm:$0xff]
        %s219 = scalar_lea.vmem %s183, 24 [#allocation2]
        %v220 = vld [vmem:[%s219] sm:$0xff]
        %s221 = scalar_lea.vmem %s183, 32 [#allocation2]
        %v222 = vld [vmem:[%s221] sm:$0xff]
        %s223 = scalar_lea.vmem %s183, 40 [#allocation2]
        %v224 = vld [vmem:[%s223] sm:$0xff]
        %s225 = scalar_lea.vmem %s183, 48 [#allocation2]
        %v226 = vld [vmem:[%s225] sm:$0xff]
        %s227 = scalar_lea.vmem %s183, 56 [#allocation2]
        %v228 = vld [vmem:[%s227] sm:$0xff]
        %v229 = vpack.c.bf16 %v216, %v214
        %v230 = vpack.c.bf16 %v220, %v218
        %v231 = vpack.c.bf16 %v224, %v222
        %v232 = vpack.c.bf16 %v228, %v226
        %v235 = vunpack.c.l.b16 %v202
        %v236 = vunpack.c.l.b16 %v203
        %v237 = vpack.c.b16 %v236, %v235
        %vm239 = vcmask 130048
        %v241 = vsel %vm239, %v229, 0
        %v244 = vsel %vm239, %v230, 0
        %v247 = vsel %vm239, %v231, 0
        %v250 = vsel %vm239, %v232, 0
        %252 = vmatprep.subr.bf16.mxu0 0
        %253 = vmatpush1.bf16.msra.mxu0 0
        %254 = vmatprep.subr.bf16.mxu0 0
        %255 = vmatpush1.bf16.msra.mxu0 0
        %256 = vmatprep.subr.bf16.mxu0 0
        %257 = vmatpush1.bf16.msra.mxu0 0
        %258 = vmatprep.subr.bf16.mxu0 0
        %259 = vmatpush1.bf16.msra.mxu0 0
        %260 = vmatprep.subr.bf16.mxu0 0
        %261 = vmatpush1.bf16.msra.mxu0 0
        %262 = vmatprep.subr.bf16.mxu0 0
        %263 = vmatpush1.bf16.msra.mxu0 0
        %264 = vmatprep.subr.bf16.mxu0 0
        %265 = vmatpush1.bf16.msra.mxu0 0
        %266 = vmatprep.subr.bf16.mxu0 0
        %267 = vmatpush1.bf16.msra.mxu0 %v237
        %268 = vmatprep.subr.bf16.mxu0 0
        %269 = vmatpush2.bf16.msra.mxu0 0
        %270 = vmatprep.subr.bf16.mxu0 0
        %271 = vmatpush2.bf16.msra.mxu0 0
        %272 = vmatprep.subr.bf16.mxu0 0
        %273 = vmatpush2.bf16.msra.mxu0 0
        %274 = vmatprep.subr.bf16.mxu0 0
        %275 = vmatpush2.bf16.msra.mxu0 0
        %276 = vmatprep.subr.bf16.mxu0 0
        %277 = vmatpush2.bf16.msra.mxu0 0
        %278 = vmatprep.subr.bf16.mxu0 0
        %279 = vmatpush2.bf16.msra.mxu0 0
        %280 = vmatprep.subr.bf16.mxu0 0
        %281 = vmatpush2.bf16.msra.mxu0 0
        %282 = vmatprep.subr.bf16.mxu0 0
        %283 = vmatpush2.bf16.msra.mxu0 0
        %284 = vmatprep.mubr.bf16.mxu0 0
        %285 = vmatmul.mubr.bf16.gmra.mxu0 %v241
        %v286 = vpop.f32.mrf.mxu0
        %v287 = vadd.f32 0.0, %v286
        %v288 = vpop.f32.mrf.mxu0
        %v289 = vpop.f32.mrf.mxu0
        %v290 = vadd.f32 0.0, %v289
        %v291 = vpop.f32.mrf.mxu0
        %292 = vmatprep.mubr.bf16.mxu0 0
        %293 = vmatmul.mubr.bf16.gmra.mxu0 %v244
        %v294 = vpop.f32.mrf.mxu0
        %v295 = vadd.f32 0.0, %v294
        %v296 = vpop.f32.mrf.mxu0
        %v297 = vpop.f32.mrf.mxu0
        %v298 = vadd.f32 0.0, %v297
        %v299 = vpop.f32.mrf.mxu0
        %300 = vmatprep.mubr.bf16.mxu0 0
        %301 = vmatmul.mubr.bf16.gmra.mxu0 %v247
        %v302 = vpop.f32.mrf.mxu0
        %v303 = vadd.f32 0.0, %v302
        %v304 = vpop.f32.mrf.mxu0
        %v305 = vpop.f32.mrf.mxu0
        %v306 = vadd.f32 0.0, %v305
        %v307 = vpop.f32.mrf.mxu0
        %308 = vmatprep.mubr.bf16.mxu0 0
        %309 = vmatmul.mubr.bf16.gmra.mxu0 %v250
        %v310 = vpop.f32.mrf.mxu0
        %v311 = vadd.f32 0.0, %v310
        %v312 = vpop.f32.mrf.mxu0
        %v313 = vpop.f32.mrf.mxu0
        %v314 = vadd.f32 0.0, %v313
        %v315 = vpop.f32.mrf.mxu0
        %316 = vdwg.mxu0
        %v321 = vunpack.c.l.b16 %v204
        %v322 = vunpack.c.l.b16 %v205
        %v323 = vunpack.c.l.b16 %v206
        %v324 = vunpack.c.l.b16 %v207
        %v325 = vpack.c.b16 %v322, %v321
        %v326 = vpack.c.b16 %v324, %v323
        %vm329 = vcmask 261120
        %v331 = vsel %vm329, 0, 0
        %333 = vmatprep.subr.bf16.mxu0 0
        %334 = vmatpush1.bf16.msra.mxu0 0
        %335 = vmatprep.subr.bf16.mxu0 0
        %336 = vmatpush1.bf16.msra.mxu0 0
        %337 = vmatprep.subr.bf16.mxu0 0
        %338 = vmatpush1.bf16.msra.mxu0 0
        %339 = vmatprep.subr.bf16.mxu0 0
        %340 = vmatpush1.bf16.msra.mxu0 0
        %341 = vmatprep.subr.bf16.mxu0 0
        %342 = vmatpush1.bf16.msra.mxu0 0
        %343 = vmatprep.subr.bf16.mxu0 0
        %344 = vmatpush1.bf16.msra.mxu0 0
        %345 = vmatprep.subr.bf16.mxu0 0
        %346 = vmatpush1.bf16.msra.mxu0 %v326
        %347 = vmatprep.subr.bf16.mxu0 0
        %348 = vmatpush1.bf16.msra.mxu0 %v325
        %349 = vmatprep.subr.bf16.mxu0 0
        %350 = vmatpush2.bf16.msra.mxu0 0
        %351 = vmatprep.subr.bf16.mxu0 0
        %352 = vmatpush2.bf16.msra.mxu0 0
        %353 = vmatprep.subr.bf16.mxu0 0
        %354 = vmatpush2.bf16.msra.mxu0 0
        %355 = vmatprep.subr.bf16.mxu0 0
        %356 = vmatpush2.bf16.msra.mxu0 0
        %357 = vmatprep.subr.bf16.mxu0 0
        %358 = vmatpush2.bf16.msra.mxu0 0
        %359 = vmatprep.subr.bf16.mxu0 0
        %360 = vmatpush2.bf16.msra.mxu0 0
        %361 = vmatprep.subr.bf16.mxu0 0
        %362 = vmatpush2.bf16.msra.mxu0 0
        %363 = vmatprep.subr.bf16.mxu0 0
        %364 = vmatpush2.bf16.msra.mxu0 0
        %365 = vmatprep.mubr.bf16.mxu0 0
        %366 = vmatmul.mubr.bf16.gmra.mxu0 %v331
        %v367 = vpop.f32.mrf.mxu0
        %v368 = vadd.f32 0.0, %v367
        %v369 = vpop.f32.mrf.mxu0
        %v370 = vpop.f32.mrf.mxu0
        %v371 = vpop.f32.mrf.mxu0
        %372 = vdwg.mxu0
        %v373 = vadd.f32 %v287, %v368
        %v374 = vxor.u32 %v373, 2147483648
        %v375 = vmul.f32 %v374, 1.442695
        %v376 = vpow.pop %v375
        %v377 = vadd.f32 %v376, 1.0
        %v378 = vrcp.pop %v377
        %v379 = vmul.f32 1.0, %v378
        %v380 = vtanh.pop %v373
        %v381 = vmul.f32 %v379, 0.0
        %383 = vrot.lane.b32.xlu0 %v380, 64
        %v384 = vpop.permute.xlu0 %383
        %v386 = vmul.f32 %v379, %v384
        %388 = vrot.lane.b32.xlu0 %v386, 32
        %v389 = vpop.permute.xlu0 %388
        %v391 = vadd.f32 %v381, %v389
        %v392 = vtanh.pop %v391
        %394 = vrot.lane.b32.xlu0 %v392, 64
        %v395 = vpop.permute.xlu0 %394
        %v397 = vmul.f32 %v379, %v395
        %v398 = vpack.c.bf16 %v397, %v397
        %400 = vrot.lane.b32.xlu0 %v398, 32
        %v401 = vpop.permute.xlu0 %400
        %v403 = vsel %vm329, %v401, 0
        %405 = vmatprep.subr.bf16.mxu0 0
        %406 = vmatpush1.bf16.msra.mxu0 0
        %407 = vmatprep.subr.bf16.mxu0 0
        %408 = vmatpush1.bf16.msra.mxu0 0
        %409 = vmatprep.subr.bf16.mxu0 0
        %410 = vmatpush1.bf16.msra.mxu0 0
        %411 = vmatprep.subr.bf16.mxu0 0
        %412 = vmatpush1.bf16.msra.mxu0 0
        %413 = vmatprep.subr.bf16.mxu0 0
        %414 = vmatpush1.bf16.msra.mxu0 0
        %415 = vmatprep.subr.bf16.mxu0 0
        %416 = vmatpush1.bf16.msra.mxu0 0
        %417 = vmatprep.subr.bf16.mxu0 0
        %418 = vmatpush1.bf16.msra.mxu0 %v326
        %419 = vmatprep.subr.bf16.mxu0 0
        %420 = vmatpush1.bf16.msra.mxu0 %v325
        %421 = vmatprep.subr.bf16.mxu0 0
        %422 = vmatpush2.bf16.msra.mxu0 0
        %423 = vmatprep.subr.bf16.mxu0 0
        %424 = vmatpush2.bf16.msra.mxu0 0
        %425 = vmatprep.subr.bf16.mxu0 0
        %426 = vmatpush2.bf16.msra.mxu0 0
        %427 = vmatprep.subr.bf16.mxu0 0
        %428 = vmatpush2.bf16.msra.mxu0 0
        %429 = vmatprep.subr.bf16.mxu0 0
        %430 = vmatpush2.bf16.msra.mxu0 0
        %431 = vmatprep.subr.bf16.mxu0 0
        %432 = vmatpush2.bf16.msra.mxu0 0
        %433 = vmatprep.subr.bf16.mxu0 0
        %434 = vmatpush2.bf16.msra.mxu0 0
        %435 = vmatprep.subr.bf16.mxu0 0
        %436 = vmatpush2.bf16.msra.mxu0 0
        %437 = vmatprep.mubr.bf16.mxu0 0
        %438 = vmatmul.mubr.bf16.gmra.mxu0 %v403
        %v439 = vpop.f32.mrf.mxu0
        %v440 = vadd.f32 0.0, %v439
        %v441 = vpop.f32.mrf.mxu0
        %v442 = vpop.f32.mrf.mxu0
        %v443 = vpop.f32.mrf.mxu0
        %444 = vdwg.mxu0
        %v445 = vadd.f32 %v290, %v440
        %v446 = vxor.u32 %v445, 2147483648
        %v447 = vmul.f32 %v446, 1.442695
        %v448 = vpow.pop %v447
        %v449 = vadd.f32 %v448, 1.0
        %v450 = vrcp.pop %v449
        %v451 = vmul.f32 1.0, %v450
        %v452 = vtanh.pop %v445
        %v453 = vmul.f32 %v451, %v391
        %455 = vrot.lane.b32.xlu0 %v452, 64
        %v456 = vpop.permute.xlu0 %455
        %v458 = vmul.f32 %v451, %v456
        %460 = vrot.lane.b32.xlu0 %v458, 32
        %v461 = vpop.permute.xlu0 %460
        %v463 = vadd.f32 %v453, %v461
        %v464 = vtanh.pop %v463
        %466 = vrot.lane.b32.xlu0 %v464, 64
        %v467 = vpop.permute.xlu0 %466
        %v469 = vmul.f32 %v451, %v467
        %v470 = vpack.c.bf16 %v469, %v469
        %472 = vrot.lane.b32.xlu0 %v470, 32
        %v473 = vpop.permute.xlu0 %472
        %v475 = vsel %vm329, %v473, 0
        %477 = vmatprep.subr.bf16.mxu0 0
        %478 = vmatpush1.bf16.msra.mxu0 0
        %479 = vmatprep.subr.bf16.mxu0 0
        %480 = vmatpush1.bf16.msra.mxu0 0
        %481 = vmatprep.subr.bf16.mxu0 0
        %482 = vmatpush1.bf16.msra.mxu0 0
        %483 = vmatprep.subr.bf16.mxu0 0
        %484 = vmatpush1.bf16.msra.mxu0 0
        %485 = vmatprep.subr.bf16.mxu0 0
        %486 = vmatpush1.bf16.msra.mxu0 0
        %487 = vmatprep.subr.bf16.mxu0 0
        %488 = vmatpush1.bf16.msra.mxu0 0
        %489 = vmatprep.subr.bf16.mxu0 0
        %490 = vmatpush1.bf16.msra.mxu0 %v326
        %491 = vmatprep.subr.bf16.mxu0 0
        %492 = vmatpush1.bf16.msra.mxu0 %v325
        %493 = vmatprep.subr.bf16.mxu0 0
        %494 = vmatpush2.bf16.msra.mxu0 0
        %495 = vmatprep.subr.bf16.mxu0 0
        %496 = vmatpush2.bf16.msra.mxu0 0
        %497 = vmatprep.subr.bf16.mxu0 0
        %498 = vmatpush2.bf16.msra.mxu0 0
        %499 = vmatprep.subr.bf16.mxu0 0
        %500 = vmatpush2.bf16.msra.mxu0 0
        %501 = vmatprep.subr.bf16.mxu0 0
        %502 = vmatpush2.bf16.msra.mxu0 0
        %503 = vmatprep.subr.bf16.mxu0 0
        %504 = vmatpush2.bf16.msra.mxu0 0
        %505 = vmatprep.subr.bf16.mxu0 0
        %506 = vmatpush2.bf16.msra.mxu0 0
        %507 = vmatprep.subr.bf16.mxu0 0
        %508 = vmatpush2.bf16.msra.mxu0 0
        %509 = vmatprep.mubr.bf16.mxu0 0
        %510 = vmatmul.mubr.bf16.gmra.mxu0 %v475
        %v511 = vpop.f32.mrf.mxu0
        %v512 = vadd.f32 0.0, %v511
        %v513 = vpop.f32.mrf.mxu0
        %v514 = vpop.f32.mrf.mxu0
        %v515 = vpop.f32.mrf.mxu0
        %516 = vdwg.mxu0
        %v517 = vadd.f32 %v295, %v512
        %v518 = vxor.u32 %v517, 2147483648
        %v519 = vmul.f32 %v518, 1.442695
        %v520 = vpow.pop %v519
        %v521 = vadd.f32 %v520, 1.0
        %v522 = vrcp.pop %v521
        %v523 = vmul.f32 1.0, %v522
        %v524 = vtanh.pop %v517
        %v525 = vmul.f32 %v523, %v463
        %527 = vrot.lane.b32.xlu0 %v524, 64
        %v528 = vpop.permute.xlu0 %527
        %v530 = vmul.f32 %v523, %v528
        %532 = vrot.lane.b32.xlu0 %v530, 32
        %v533 = vpop.permute.xlu0 %532
        %v535 = vadd.f32 %v525, %v533
        %v536 = vtanh.pop %v535
        %538 = vrot.lane.b32.xlu0 %v536, 64
        %v539 = vpop.permute.xlu0 %538
        %v541 = vmul.f32 %v523, %v539
        %v542 = vpack.c.bf16 %v541, %v541
        %544 = vrot.lane.b32.xlu0 %v542, 32
        %v545 = vpop.permute.xlu0 %544
        %v547 = vsel %vm329, %v545, 0
        %549 = vmatprep.subr.bf16.mxu0 0
        %550 = vmatpush1.bf16.msra.mxu0 0
        %551 = vmatprep.subr.bf16.mxu0 0
        %552 = vmatpush1.bf16.msra.mxu0 0
        %553 = vmatprep.subr.bf16.mxu0 0
        %554 = vmatpush1.bf16.msra.mxu0 0
        %555 = vmatprep.subr.bf16.mxu0 0
        %556 = vmatpush1.bf16.msra.mxu0 0
        %557 = vmatprep.subr.bf16.mxu0 0
        %558 = vmatpush1.bf16.msra.mxu0 0
        %559 = vmatprep.subr.bf16.mxu0 0
        %560 = vmatpush1.bf16.msra.mxu0 0
        %561 = vmatprep.subr.bf16.mxu0 0
        %562 = vmatpush1.bf16.msra.mxu0 %v326
        %563 = vmatprep.subr.bf16.mxu0 0
        %564 = vmatpush1.bf16.msra.mxu0 %v325
        %565 = vmatprep.subr.bf16.mxu0 0
        %566 = vmatpush2.bf16.msra.mxu0 0
        %567 = vmatprep.subr.bf16.mxu0 0
        %568 = vmatpush2.bf16.msra.mxu0 0
        %569 = vmatprep.subr.bf16.mxu0 0
        %570 = vmatpush2.bf16.msra.mxu0 0
        %571 = vmatprep.subr.bf16.mxu0 0
        %572 = vmatpush2.bf16.msra.mxu0 0
        %573 = vmatprep.subr.bf16.mxu0 0
        %574 = vmatpush2.bf16.msra.mxu0 0
        %575 = vmatprep.subr.bf16.mxu0 0
        %576 = vmatpush2.bf16.msra.mxu0 0
        %577 = vmatprep.subr.bf16.mxu0 0
        %578 = vmatpush2.bf16.msra.mxu0 0
        %579 = vmatprep.subr.bf16.mxu0 0
        %580 = vmatpush2.bf16.msra.mxu0 0
        %581 = vmatprep.mubr.bf16.mxu0 0
        %582 = vmatmul.mubr.bf16.gmra.mxu0 %v547
        %v583 = vpop.f32.mrf.mxu0
        %v584 = vadd.f32 0.0, %v583
        %v585 = vpop.f32.mrf.mxu0
        %v586 = vpop.f32.mrf.mxu0
        %v587 = vpop.f32.mrf.mxu0
        %588 = vdwg.mxu0
        %v589 = vadd.f32 %v298, %v584
        %v590 = vxor.u32 %v589, 2147483648
        %v591 = vmul.f32 %v590, 1.442695
        %v592 = vpow.pop %v591
        %v593 = vadd.f32 %v592, 1.0
        %v594 = vrcp.pop %v593
        %v595 = vmul.f32 1.0, %v594
        %v596 = vtanh.pop %v589
        %v597 = vmul.f32 %v595, %v535
        %599 = vrot.lane.b32.xlu0 %v596, 64
        %v600 = vpop.permute.xlu0 %599
        %v602 = vmul.f32 %v595, %v600
        %604 = vrot.lane.b32.xlu0 %v602, 32
        %v605 = vpop.permute.xlu0 %604
        %v607 = vadd.f32 %v597, %v605
        %v608 = vtanh.pop %v607
        %610 = vrot.lane.b32.xlu0 %v608, 64
        %v611 = vpop.permute.xlu0 %610
        %v613 = vmul.f32 %v595, %v611
        %v614 = vpack.c.bf16 %v613, %v613
        %616 = vrot.lane.b32.xlu0 %v614, 32
        %v617 = vpop.permute.xlu0 %616
        %v619 = vsel %vm329, %v617, 0
        %621 = vmatprep.subr.bf16.mxu0 0
        %622 = vmatpush1.bf16.msra.mxu0 0
        %623 = vmatprep.subr.bf16.mxu0 0
        %624 = vmatpush1.bf16.msra.mxu0 0
        %625 = vmatprep.subr.bf16.mxu0 0
        %626 = vmatpush1.bf16.msra.mxu0 0
        %627 = vmatprep.subr.bf16.mxu0 0
        %628 = vmatpush1.bf16.msra.mxu0 0
        %629 = vmatprep.subr.bf16.mxu0 0
        %630 = vmatpush1.bf16.msra.mxu0 0
        %631 = vmatprep.subr.bf16.mxu0 0
        %632 = vmatpush1.bf16.msra.mxu0 0
        %633 = vmatprep.subr.bf16.mxu0 0
        %634 = vmatpush1.bf16.msra.mxu0 %v326
        %635 = vmatprep.subr.bf16.mxu0 0
        %636 = vmatpush1.bf16.msra.mxu0 %v325
        %637 = vmatprep.subr.bf16.mxu0 0
        %638 = vmatpush2.bf16.msra.mxu0 0
        %639 = vmatprep.subr.bf16.mxu0 0
        %640 = vmatpush2.bf16.msra.mxu0 0
        %641 = vmatprep.subr.bf16.mxu0 0
        %642 = vmatpush2.bf16.msra.mxu0 0
        %643 = vmatprep.subr.bf16.mxu0 0
        %644 = vmatpush2.bf16.msra.mxu0 0
        %645 = vmatprep.subr.bf16.mxu0 0
        %646 = vmatpush2.bf16.msra.mxu0 0
        %647 = vmatprep.subr.bf16.mxu0 0
        %648 = vmatpush2.bf16.msra.mxu0 0
        %649 = vmatprep.subr.bf16.mxu0 0
        %650 = vmatpush2.bf16.msra.mxu0 0
        %651 = vmatprep.subr.bf16.mxu0 0
        %652 = vmatpush2.bf16.msra.mxu0 0
        %653 = vmatprep.mubr.bf16.mxu0 0
        %654 = vmatmul.mubr.bf16.gmra.mxu0 %v619
        %v655 = vpop.f32.mrf.mxu0
        %v656 = vadd.f32 0.0, %v655
        %v657 = vpop.f32.mrf.mxu0
        %v658 = vpop.f32.mrf.mxu0
        %v659 = vpop.f32.mrf.mxu0
        %660 = vdwg.mxu0
        %v661 = vadd.f32 %v303, %v656
        %v662 = vxor.u32 %v661, 2147483648
        %v663 = vmul.f32 %v662, 1.442695
        %v664 = vpow.pop %v663
        %v665 = vadd.f32 %v664, 1.0
        %v666 = vrcp.pop %v665
        %v667 = vmul.f32 1.0, %v666
        %v668 = vtanh.pop %v661
        %v669 = vmul.f32 %v667, %v607
        %671 = vrot.lane.b32.xlu0 %v668, 64
        %v672 = vpop.permute.xlu0 %671
        %v674 = vmul.f32 %v667, %v672
        %676 = vrot.lane.b32.xlu0 %v674, 32
        %v677 = vpop.permute.xlu0 %676
        %v679 = vadd.f32 %v669, %v677
        %v680 = vtanh.pop %v679
        %682 = vrot.lane.b32.xlu0 %v680, 64
        %v683 = vpop.permute.xlu0 %682
        %v685 = vmul.f32 %v667, %v683
        %v686 = vpack.c.bf16 %v685, %v685
        %688 = vrot.lane.b32.xlu0 %v686, 32
        %v689 = vpop.permute.xlu0 %688
        %v691 = vsel %vm329, %v689, 0
        %693 = vmatprep.subr.bf16.mxu0 0
        %694 = vmatpush1.bf16.msra.mxu0 0
        %695 = vmatprep.subr.bf16.mxu0 0
        %696 = vmatpush1.bf16.msra.mxu0 0
        %697 = vmatprep.subr.bf16.mxu0 0
        %698 = vmatpush1.bf16.msra.mxu0 0
        %699 = vmatprep.subr.bf16.mxu0 0
        %700 = vmatpush1.bf16.msra.mxu0 0
        %701 = vmatprep.subr.bf16.mxu0 0
        %702 = vmatpush1.bf16.msra.mxu0 0
        %703 = vmatprep.subr.bf16.mxu0 0
        %704 = vmatpush1.bf16.msra.mxu0 0
        %705 = vmatprep.subr.bf16.mxu0 0
        %706 = vmatpush1.bf16.msra.mxu0 %v326
        %707 = vmatprep.subr.bf16.mxu0 0
        %708 = vmatpush1.bf16.msra.mxu0 %v325
        %709 = vmatprep.subr.bf16.mxu0 0
        %710 = vmatpush2.bf16.msra.mxu0 0
        %711 = vmatprep.subr.bf16.mxu0 0
        %712 = vmatpush2.bf16.msra.mxu0 0
        %713 = vmatprep.subr.bf16.mxu0 0
        %714 = vmatpush2.bf16.msra.mxu0 0
        %715 = vmatprep.subr.bf16.mxu0 0
        %716 = vmatpush2.bf16.msra.mxu0 0
        %717 = vmatprep.subr.bf16.mxu0 0
        %718 = vmatpush2.bf16.msra.mxu0 0
        %719 = vmatprep.subr.bf16.mxu0 0
        %720 = vmatpush2.bf16.msra.mxu0 0
        %721 = vmatprep.subr.bf16.mxu0 0
        %722 = vmatpush2.bf16.msra.mxu0 0
        %723 = vmatprep.subr.bf16.mxu0 0
        %724 = vmatpush2.bf16.msra.mxu0 0
        %725 = vmatprep.mubr.bf16.mxu0 0
        %726 = vmatmul.mubr.bf16.gmra.mxu0 %v691
        %v727 = vpop.f32.mrf.mxu0
        %v728 = vadd.f32 0.0, %v727
        %v729 = vpop.f32.mrf.mxu0
        %v730 = vpop.f32.mrf.mxu0
        %v731 = vpop.f32.mrf.mxu0
        %732 = vdwg.mxu0
        %v733 = vadd.f32 %v306, %v728
        %v734 = vxor.u32 %v733, 2147483648
        %v735 = vmul.f32 %v734, 1.442695
        %v736 = vpow.pop %v735
        %v737 = vadd.f32 %v736, 1.0
        %v738 = vrcp.pop %v737
        %v739 = vmul.f32 1.0, %v738
        %v740 = vtanh.pop %v733
        %v741 = vmul.f32 %v739, %v679
        %743 = vrot.lane.b32.xlu0 %v740, 64
        %v744 = vpop.permute.xlu0 %743
        %v746 = vmul.f32 %v739, %v744
        %748 = vrot.lane.b32.xlu0 %v746, 32
        %v749 = vpop.permute.xlu0 %748
        %v751 = vadd.f32 %v741, %v749
        %v752 = vtanh.pop %v751
        %754 = vrot.lane.b32.xlu0 %v752, 64
        %v755 = vpop.permute.xlu0 %754
        %v757 = vmul.f32 %v739, %v755
        %v758 = vpack.c.bf16 %v757, %v757
        %760 = vrot.lane.b32.xlu0 %v758, 32
        %v761 = vpop.permute.xlu0 %760
        %v763 = vsel %vm329, %v761, 0
        %765 = vmatprep.subr.bf16.mxu0 0
        %766 = vmatpush1.bf16.msra.mxu0 0
        %767 = vmatprep.subr.bf16.mxu0 0
        %768 = vmatpush1.bf16.msra.mxu0 0
        %769 = vmatprep.subr.bf16.mxu0 0
        %770 = vmatpush1.bf16.msra.mxu0 0
        %771 = vmatprep.subr.bf16.mxu0 0
        %772 = vmatpush1.bf16.msra.mxu0 0
        %773 = vmatprep.subr.bf16.mxu0 0
        %774 = vmatpush1.bf16.msra.mxu0 0
        %775 = vmatprep.subr.bf16.mxu0 0
        %776 = vmatpush1.bf16.msra.mxu0 0
        %777 = vmatprep.subr.bf16.mxu0 0
        %778 = vmatpush1.bf16.msra.mxu0 %v326
        %779 = vmatprep.subr.bf16.mxu0 0
        %780 = vmatpush1.bf16.msra.mxu0 %v325
        %781 = vmatprep.subr.bf16.mxu0 0
        %782 = vmatpush2.bf16.msra.mxu0 0
        %783 = vmatprep.subr.bf16.mxu0 0
        %784 = vmatpush2.bf16.msra.mxu0 0
        %785 = vmatprep.subr.bf16.mxu0 0
        %786 = vmatpush2.bf16.msra.mxu0 0
        %787 = vmatprep.subr.bf16.mxu0 0
        %788 = vmatpush2.bf16.msra.mxu0 0
        %789 = vmatprep.subr.bf16.mxu0 0
        %790 = vmatpush2.bf16.msra.mxu0 0
        %791 = vmatprep.subr.bf16.mxu0 0
        %792 = vmatpush2.bf16.msra.mxu0 0
        %793 = vmatprep.subr.bf16.mxu0 0
        %794 = vmatpush2.bf16.msra.mxu0 0
        %795 = vmatprep.subr.bf16.mxu0 0
        %796 = vmatpush2.bf16.msra.mxu0 0
        %797 = vmatprep.mubr.bf16.mxu0 0
        %798 = vmatmul.mubr.bf16.gmra.mxu0 %v763
        %v799 = vpop.f32.mrf.mxu0
        %v800 = vadd.f32 0.0, %v799
        %v801 = vpop.f32.mrf.mxu0
        %v802 = vpop.f32.mrf.mxu0
        %v803 = vpop.f32.mrf.mxu0
        %804 = vdwg.mxu0
        %v805 = vadd.f32 %v311, %v800
        %v806 = vxor.u32 %v805, 2147483648
        %v807 = vmul.f32 %v806, 1.442695
        %v808 = vpow.pop %v807
        %v809 = vadd.f32 %v808, 1.0
        %v810 = vrcp.pop %v809
        %v811 = vmul.f32 1.0, %v810
        %v812 = vtanh.pop %v805
        %v813 = vmul.f32 %v811, %v751
        %815 = vrot.lane.b32.xlu0 %v812, 64
        %v816 = vpop.permute.xlu0 %815
        %v818 = vmul.f32 %v811, %v816
        %820 = vrot.lane.b32.xlu0 %v818, 32
        %v821 = vpop.permute.xlu0 %820
        %v823 = vadd.f32 %v813, %v821
        %v824 = vtanh.pop %v823
        %826 = vrot.lane.b32.xlu0 %v824, 64
        %v827 = vpop.permute.xlu0 %826
        %v829 = vmul.f32 %v811, %v827
        %v830 = vpack.c.bf16 %v829, %v829
        %832 = vrot.lane.b32.xlu0 %v830, 32
        %v833 = vpop.permute.xlu0 %832
        %v835 = vsel %vm329, %v833, 0
        %837 = vmatprep.subr.bf16.mxu0 0
        %838 = vmatpush1.bf16.msra.mxu0 0
        %839 = vmatprep.subr.bf16.mxu0 0
        %840 = vmatpush1.bf16.msra.mxu0 0
        %841 = vmatprep.subr.bf16.mxu0 0
        %842 = vmatpush1.bf16.msra.mxu0 0
        %843 = vmatprep.subr.bf16.mxu0 0
        %844 = vmatpush1.bf16.msra.mxu0 0
        %845 = vmatprep.subr.bf16.mxu0 0
        %846 = vmatpush1.bf16.msra.mxu0 0
        %847 = vmatprep.subr.bf16.mxu0 0
        %848 = vmatpush1.bf16.msra.mxu0 0
        %849 = vmatprep.subr.bf16.mxu0 0
        %850 = vmatpush1.bf16.msra.mxu0 %v326
        %851 = vmatprep.subr.bf16.mxu0 0
        %852 = vmatpush1.bf16.msra.mxu0 %v325
        %853 = vmatprep.subr.bf16.mxu0 0
        %854 = vmatpush2.bf16.msra.mxu0 0
        %855 = vmatprep.subr.bf16.mxu0 0
        %856 = vmatpush2.bf16.msra.mxu0 0
        %857 = vmatprep.subr.bf16.mxu0 0
        %858 = vmatpush2.bf16.msra.mxu0 0
        %859 = vmatprep.subr.bf16.mxu0 0
        %860 = vmatpush2.bf16.msra.mxu0 0
        %861 = vmatprep.subr.bf16.mxu0 0
        %862 = vmatpush2.bf16.msra.mxu0 0
        %863 = vmatprep.subr.bf16.mxu0 0
        %864 = vmatpush2.bf16.msra.mxu0 0
        %865 = vmatprep.subr.bf16.mxu0 0
        %866 = vmatpush2.bf16.msra.mxu0 0
        %867 = vmatprep.subr.bf16.mxu0 0
        %868 = vmatpush2.bf16.msra.mxu0 0
        %869 = vmatprep.mubr.bf16.mxu0 0
        %870 = vmatmul.mubr.bf16.gmra.mxu0 %v835
        %v871 = vpop.f32.mrf.mxu0
        %v872 = vadd.f32 0.0, %v871
        %v873 = vpop.f32.mrf.mxu0
        %v874 = vpop.f32.mrf.mxu0
        %v875 = vpop.f32.mrf.mxu0
        %876 = vdwg.mxu0
        %v877 = vadd.f32 %v314, %v872
        %v878 = vxor.u32 %v877, 2147483648
        %v879 = vmul.f32 %v878, 1.442695
        %v880 = vpow.pop %v879
        %v881 = vadd.f32 %v880, 1.0
        %v882 = vrcp.pop %v881
        %v883 = vmul.f32 1.0, %v882
        %v884 = vtanh.pop %v877
        %v885 = vmul.f32 %v883, %v823
        %887 = vrot.lane.b32.xlu0 %v884, 64
        %v888 = vpop.permute.xlu0 %887
        %v890 = vmul.f32 %v883, %v888
        %892 = vrot.lane.b32.xlu0 %v890, 32
        %v893 = vpop.permute.xlu0 %892
        %v895 = vadd.f32 %v885, %v893
        %v896 = vtanh.pop %v895
        %898 = vrot.lane.b32.xlu0 %v896, 64
        %v899 = vpop.permute.xlu0 %898
        %v901 = vmul.f32 %v883, %v899
        %v902 = vpack.c.bf16 %v469, %v397
        %v903 = vpack.c.bf16 %v613, %v541
        %v904 = vpack.c.bf16 %v757, %v685
        %v905 = vpack.c.bf16 %v901, %v829
        %v906 = vlaneseq
        %v907 = vshrl.u32 %v906, 7
        %v908 = vsub.s32 0, %v907
        %v909 = vrot.slane %v213, %v908
        %914 = vrot.lane.b32.xlu0 %v902, 32
        %v915 = vpop.permute.xlu0 %914
        %916 = vrot.lane.b32.xlu0 %v903, 32
        %v917 = vpop.permute.xlu0 %916
        %918 = vrot.lane.b32.xlu0 %v904, 32
        %v919 = vpop.permute.xlu0 %918
        %920 = vrot.lane.b32.xlu0 %v905, 32
        %v921 = vpop.permute.xlu0 %920
        %v926 = vunpack.c.l.b16 %v208
        %v927 = vunpack.c.l.b16 %v209
        %v928 = vunpack.c.l.b16 %v210
        %v929 = vunpack.c.l.b16 %v211
        %v930 = vpack.c.b16 %v927, %v926
        %v931 = vpack.c.b16 %v929, %v928
        %v935 = vsel %vm329, %v915, 0
        %v938 = vsel %vm329, %v917, 0
        %v941 = vsel %vm329, %v919, 0
        %v944 = vsel %vm329, %v921, 0
        %946 = vmatprep.subr.bf16.mxu0 0
        %947 = vmatpush1.bf16.msra.mxu0 0
        %948 = vmatprep.subr.bf16.mxu0 0
        %949 = vmatpush1.bf16.msra.mxu0 0
        %950 = vmatprep.subr.bf16.mxu0 0
        %951 = vmatpush1.bf16.msra.mxu0 0
        %952 = vmatprep.subr.bf16.mxu0 0
        %953 = vmatpush1.bf16.msra.mxu0 0
        %954 = vmatprep.subr.bf16.mxu0 0
        %955 = vmatpush1.bf16.msra.mxu0 0
        %956 = vmatprep.subr.bf16.mxu0 0
        %957 = vmatpush1.bf16.msra.mxu0 0
        %958 = vmatprep.subr.bf16.mxu0 0
        %959 = vmatpush1.bf16.msra.mxu0 %v931
        %960 = vmatprep.subr.bf16.mxu0 0
        %961 = vmatpush1.bf16.msra.mxu0 %v930
        %962 = vmatprep.subr.bf16.mxu0 0
        %963 = vmatpush2.bf16.msra.mxu0 0
        %964 = vmatprep.subr.bf16.mxu0 0
        %965 = vmatpush2.bf16.msra.mxu0 0
        %966 = vmatprep.subr.bf16.mxu0 0
        %967 = vmatpush2.bf16.msra.mxu0 0
        %968 = vmatprep.subr.bf16.mxu0 0
        %969 = vmatpush2.bf16.msra.mxu0 0
        %970 = vmatprep.subr.bf16.mxu0 0
        %971 = vmatpush2.bf16.msra.mxu0 0
        %972 = vmatprep.subr.bf16.mxu0 0
        %973 = vmatpush2.bf16.msra.mxu0 0
        %974 = vmatprep.subr.bf16.mxu0 0
        %975 = vmatpush2.bf16.msra.mxu0 0
        %976 = vmatprep.subr.bf16.mxu0 0
        %977 = vmatpush2.bf16.msra.mxu0 0
        %978 = vmatprep.mubr.bf16.mxu0 0
        %979 = vmatmul.mubr.bf16.gmra.mxu0 %v935
        %v980 = vpop.f32.mrf.mxu0
        %v981 = vadd.f32 %v909, %v980
        %v982 = vpop.f32.mrf.mxu0
        %v983 = vpop.f32.mrf.mxu0
        %v984 = vadd.f32 %v909, %v983
        %v985 = vpop.f32.mrf.mxu0
        %986 = vmatprep.mubr.bf16.mxu0 0
        %987 = vmatmul.mubr.bf16.gmra.mxu0 %v938
        %v988 = vpop.f32.mrf.mxu0
        %v989 = vadd.f32 %v909, %v988
        %v990 = vpop.f32.mrf.mxu0
        %v991 = vpop.f32.mrf.mxu0
        %v992 = vadd.f32 %v909, %v991
        %v993 = vpop.f32.mrf.mxu0
        %994 = vmatprep.mubr.bf16.mxu0 0
        %995 = vmatmul.mubr.bf16.gmra.mxu0 %v941
        %v996 = vpop.f32.mrf.mxu0
        %v997 = vadd.f32 %v909, %v996
        %v998 = vpop.f32.mrf.mxu0
        %v999 = vpop.f32.mrf.mxu0
        %v1000 = vadd.f32 %v909, %v999
        %v1001 = vpop.f32.mrf.mxu0
        %1002 = vmatprep.mubr.bf16.mxu0 0
        %1003 = vmatmul.mubr.bf16.gmra.mxu0 %v944
        %v1004 = vpop.f32.mrf.mxu0
        %v1005 = vadd.f32 %v909, %v1004
        %v1006 = vpop.f32.mrf.mxu0
        %v1007 = vpop.f32.mrf.mxu0
        %v1008 = vadd.f32 %v909, %v1007
        %v1009 = vpop.f32.mrf.mxu0
        %1010 = vdwg.mxu0
        %v1011 = vtanh.pop %v981
        %v1012 = vtanh.pop %v984
        %v1013 = vtanh.pop %v989
        %v1014 = vtanh.pop %v992
        %v1015 = vtanh.pop %v997
        %v1016 = vtanh.pop %v1000
        %v1017 = vtanh.pop %v1005
        %v1018 = vtanh.pop %v1008
        %v1019 = vmul.f32 %v1011, 2.0
        %v1020 = vmul.f32 %v1012, 2.0
        %v1021 = vmul.f32 %v1013, 2.0
        %v1022 = vmul.f32 %v1014, 2.0
        %v1023 = vmul.f32 %v1015, 2.0
        %v1024 = vmul.f32 %v1016, 2.0
        %v1025 = vmul.f32 %v1017, 2.0
        %v1026 = vmul.f32 %v1018, 2.0
        %1027 = vst [vmem:[%s200] sm:$0xff] %v1019
        %s1028 = scalar_lea.vmem %s200, 8 [#allocation3]
        %1029 = vst [vmem:[%s1028] sm:$0xff] %v1020
        %s1030 = scalar_lea.vmem %s200, 16 [#allocation3]
        %1031 = vst [vmem:[%s1030] sm:$0xff] %v1021
        %s1032 = scalar_lea.vmem %s200, 24 [#allocation3]
        %1033 = vst [vmem:[%s1032] sm:$0xff] %v1022
        %s1034 = scalar_lea.vmem %s200, 32 [#allocation3]
        %1035 = vst [vmem:[%s1034] sm:$0xff] %v1023
        %s1036 = scalar_lea.vmem %s200, 40 [#allocation3]
        %1037 = vst [vmem:[%s1036] sm:$0xff] %v1024
        %s1038 = scalar_lea.vmem %s200, 48 [#allocation3]
        %1039 = vst [vmem:[%s1038] sm:$0xff] %v1025
        %s1040 = scalar_lea.vmem %s200, 56 [#allocation3]
        %1041 = vst [vmem:[%s1040] sm:$0xff] %v1026
        %s1042 = sand.u32 %s68, 1
        %s1043 = sand.u32 %s68, 1
        %s1044 = smul.addr %s1043, 64
        %s1045 = scalar_lea.vmem [#allocation3], %s1044
        // Predicated region
        $region67: #{actor_net_forward.1} parent=61 // pred_check
          %p1046 = pneg %p78
        $region68: #{actor_net_forward.1} parent=61 // pred_check_branch
          %1048 = sbr.rel (%p1046) target = $region70
        $region69: #{actor_net_forward.1} parent=61 // pred_region
          %s1049 = smul.addr %s13, 8
          %s1050 = scalar_lea.vmem %s2, %s1049
          // Predicated region
          $region71: #{actor_net_forward.1} parent=69 // pred_check
            _
          $region72: #{actor_net_forward.1} parent=69 // pred_check_branch
            %1052 = sbr.rel (0) target = $region74
          $region73: #{actor_net_forward.1} parent=69 // pred_region
            // Predicated region
            $region75: #{actor_net_forward.1} parent=73 // pred_check
              _
            $region76: #{actor_net_forward.1} parent=73 // pred_check_branch
              %1054 = sbr.rel (0) target = $region78
            $region77: #{actor_net_forward.1} parent=73 // pred_region
              // Predicated region
              $region90: #{actor_net_forward.1} parent=77 // pred_check
                _
              $region91: #{actor_net_forward.1} parent=77 // pred_check_branch
                %1084 = sbr.rel (0) target = $region93
              $region92: #{actor_net_forward.1} parent=77 // pred_region
                loop: start=0, step=1, limit=1
                $region94: #{actor_net_forward.1} parent=92 // loop_pre_header
                  _
                $region95: #{actor_net_forward.1} parent=92 // loop_header
                  %s1086 = sphi 0, %s1090
                  %p1087 = scmp.ge.s32.totalorder %s1086, 1
                  %s1091 = sphi %s1045, %s1045
                  %s1092 = sphi %s1050, %s1050
                $region96: #{actor_net_forward.1} parent=92 // loop_header_branch
                  %1089 = sbr.rel (%p1087) target = $region100
                $region97: #{actor_net_forward.1} parent=92 // loop_body
                  %v1093 = vld [vmem:[%s1091] sm:$0xff]
                  %1094 = vst [vmem:[%s1092] sm:$0xff] %v1093
                  %v1095 = vld [vmem:[%s1091 + $0x8] sm:$0xff]
                  %1096 = vst [vmem:[%s1092 + $0x10] sm:$0xff] %v1095
                  %v1097 = vld [vmem:[%s1091 + $0x10] sm:$0xff]
                  %1098 = vst [vmem:[%s1092 + $0x20] sm:$0xff] %v1097
                  %v1099 = vld [vmem:[%s1091 + $0x18] sm:$0xff]
                  %1100 = vst [vmem:[%s1092 + $0x30] sm:$0xff] %v1099
                  %v1101 = vld [vmem:[%s1091 + $0x20] sm:$0xff]
                  %1102 = vst [vmem:[%s1092 + $0x40] sm:$0xff] %v1101
                  %v1103 = vld [vmem:[%s1091 + $0x28] sm:$0xff]
                  %1104 = vst [vmem:[%s1092 + $0x50] sm:$0xff] %v1103
                  %v1105 = vld [vmem:[%s1091 + $0x30] sm:$0xff]
                  %1106 = vst [vmem:[%s1092 + $0x60] sm:$0xff] %v1105
                  %v1107 = vld [vmem:[%s1091 + $0x38] sm:$0xff]
                  %1108 = vst [vmem:[%s1092 + $0x70] sm:$0xff] %v1107
                $region98: #{actor_net_forward.1} parent=92 // loop_footer
                  %s1090 = sadd.s32 1, %s1086
                $region99: #{actor_net_forward.1} parent=92 // loop_footer_branch
                  %1085 = sbr.rel target = $region95
                $region100: #{actor_net_forward.1} parent=92 // loop_exit
                  _
              $region93: #{actor_net_forward.1} parent=77 // pred_fallthru
                _
              // Predicated region
              $region101: #{actor_net_forward.1} parent=77 // pred_check
                _
              $region102: #{actor_net_forward.1} parent=77 // pred_check_branch
                %1110 = sbr.rel target = $region104
              $region103: #{actor_net_forward.1} parent=77 // pred_region
                _
              $region104: #{actor_net_forward.1} parent=77 // pred_fallthru
                _
            $region78: #{actor_net_forward.1} parent=73 // pred_fallthru
              _
            // Predicated region
            $region79: #{actor_net_forward.1} parent=73 // pred_check
              _
            $region80: #{actor_net_forward.1} parent=73 // pred_check_branch
              %1056 = sbr.rel target = $region82
            $region81: #{actor_net_forward.1} parent=73 // pred_region
              %s1058 = ssub.s32 256, 1
              loop: start=0, step=1, limit=1
              $region83: #{actor_net_forward.1} parent=81 // loop_pre_header
                _
              $region84: #{actor_net_forward.1} parent=81 // loop_header
                %s1060 = sphi 0, %s1064
                %p1061 = scmp.ge.s32.totalorder %s1060, 1
                %s1065 = sphi %s1045, %s1045
                %s1066 = sphi %s1050, %s1050
              $region85: #{actor_net_forward.1} parent=81 // loop_header_branch
                %1063 = sbr.rel (%p1061) target = $region89
              $region86: #{actor_net_forward.1} parent=81 // loop_body
                %v1067 = vld [vmem:[%s1065] sm:%s1058]
                %1068 = vst [vmem:[%s1066] sm:%s1058] %v1067
                %v1069 = vld [vmem:[%s1065 + $0x8] sm:%s1058]
                %1070 = vst [vmem:[%s1066 + $0x10] sm:%s1058] %v1069
                %v1071 = vld [vmem:[%s1065 + $0x10] sm:%s1058]
                %1072 = vst [vmem:[%s1066 + $0x20] sm:%s1058] %v1071
                %v1073 = vld [vmem:[%s1065 + $0x18] sm:%s1058]
                %1074 = vst [vmem:[%s1066 + $0x30] sm:%s1058] %v1073
                %v1075 = vld [vmem:[%s1065 + $0x20] sm:%s1058]
                %1076 = vst [vmem:[%s1066 + $0x40] sm:%s1058] %v1075
                %v1077 = vld [vmem:[%s1065 + $0x28] sm:%s1058]
                %1078 = vst [vmem:[%s1066 + $0x50] sm:%s1058] %v1077
                %v1079 = vld [vmem:[%s1065 + $0x30] sm:%s1058]
                %1080 = vst [vmem:[%s1066 + $0x60] sm:%s1058] %v1079
                %v1081 = vld [vmem:[%s1065 + $0x38] sm:%s1058]
                %1082 = vst [vmem:[%s1066 + $0x70] sm:%s1058] %v1081
              $region87: #{actor_net_forward.1} parent=81 // loop_footer
                %s1064 = sadd.s32 1, %s1060
              $region88: #{actor_net_forward.1} parent=81 // loop_footer_branch
                %1059 = sbr.rel target = $region84
              $region89: #{actor_net_forward.1} parent=81 // loop_exit
                _
            $region82: #{actor_net_forward.1} parent=73 // pred_fallthru
              _
          $region74: #{actor_net_forward.1} parent=69 // pred_fallthru
            _
          %1111 = vnop
        $region70: #{actor_net_forward.1} parent=61 // pred_fallthru
          _
      $region62: #{actor_net_forward.1} parent=5 // pred_fallthru
        _
      %p1112 = scmp.le.s32.totalorder 2, %s8
      // Predicated region
      $region105: #{actor_net_forward.1} parent=5 // pred_check
        %p1113 = pneg %p1112
      $region106: #{actor_net_forward.1} parent=5 // pred_check_branch
        %1115 = sbr.rel (%p1113) target = $region108
      $region107: #{actor_net_forward.1} parent=5 // pred_region
        %s1116 = ssub.s32 %s8, 2
        // Predicated region
        $region109: #{actor_net_forward.1} parent=107 // pred_check
          %p1117 = pneg %p84
        $region110: #{actor_net_forward.1} parent=107 // pred_check_branch
          %1119 = sbr.rel (%p1117) target = $region112
        $region111: #{actor_net_forward.1} parent=107 // pred_region
          %s1120 = sand.u32 %s69, 1
          %s1121 = sand.u32 %s69, 1
          %s1122 = smul.addr %s1121, 64
          %s1123 = scalar_lea.vmem [#allocation3], %s1122
        $region112: #{actor_net_forward.1} parent=107 // pred_fallthru
          _
      $region108: #{actor_net_forward.1} parent=5 // pred_fallthru
        _
    $region6: #{actor_net_forward.1} parent=1 // loop_footer
      %s12 = sadd.s32 1, %s8
    $region7: #{actor_net_forward.1} parent=1 // loop_footer_branch
      %7 = sbr.rel target = $region3
    $region8: #{actor_net_forward.1} parent=1 // loop_exit
      _

</llo_original>
